<compile_context>
chip_gen: v6e
topology: v6e:2x2x1
jax: 0.10.0
libtpu: 0.0.40
codegen_flags: <defaults>
</compile_context>

<pallas_src>
import jax
import jax.numpy as jnp
from jax.experimental import pallas as pl
from jax.experimental.pallas import tpu as pltpu

NUM_PATCHES = 64                 # 8x8 grid of 8x8 patches on a 64x64 image
EMBED_DIM = 768
PATCH = 8
IN_CH = 3
K_FEAT = IN_CH * PATCH * PATCH   # 192 (contraction dim; no HBM-side padding)

VMEM_BLOCK_BUDGET_BYTES = 28 * 1024 * 1024   # budget used when picking BM
VMEM_LIMIT_BYTES = 48 * 1024 * 1024          # scoped-VMEM cap passed to the compiler


def _patch_embed_kernel(patch_ref, w_ref, scale_ref, shift_ref, pos_ref, out_ref):
    # patch_ref: (BM, 64, 192)        w_ref: (192, 768)
    # scale_ref/shift_ref: (1, 768)   pos_ref: (64, 768)   out_ref: (BM, 64, 768)
    bm = patch_ref.shape[0]
    # Leading-dim collapse only (no lane crossing): (BM, 64, K) -> (BM*64, K).
    p = patch_ref[...].reshape(bm * NUM_PATCHES, K_FEAT)
    acc = jnp.dot(p, w_ref[...], preferred_element_type=jnp.float32)  # (BM*64, 768) f32
    y = acc * scale_ref[...] + shift_ref[...]      # fused conv-bias + BatchNorm (eval)
    y = jnp.maximum(y, 0.0)                        # ReLU
    y = y.reshape(bm, NUM_PATCHES, EMBED_DIM) + pos_ref[...][None]    # + pos encoding
    out_ref[...] = y.astype(out_ref.dtype)         # single narrowing cast at the store


def _num_tensorcores_per_device():
    """Best-effort detection of multi-TensorCore chips (v7x, and v3/v4 megacore)."""
    try:
        kind = jax.devices()[0].device_kind.lower()
    except Exception:  # pragma: no cover - defensive
        return 1
    if ("v7" in kind) or ("7x" in kind) or ("v4" in kind) or ("v3" in kind):
        return 2
    return 1


def _pick_bm(batch, in_itemsize, out_itemsize, *, vmem_budget_bytes,
             prefer_multi_step, max_bm=64):
    """Largest divisor of `batch` that fits the VMEM budget.

    On multi-TensorCore chips prefer a grid with an even (>=2) number of steps so
    both cores get equal work under dimension_semantics=("parallel",); on single-TC
    chips take the largest block (fewest steps) — per-step overhead is pure cost.
    """
    per_image = NUM_PATCHES * (K_FEAT * in_itemsize + EMBED_DIM * out_itemsize)
    resident = 2 * (K_FEAT * EMBED_DIM * in_itemsize        # weights
                    + 2 * EMBED_DIM * 4                     # scale + shift (f32)
                    + NUM_PATCHES * EMBED_DIM * 4)          # pos encoding (f32)
    vmem_cap = max(1, (vmem_budget_bytes - resident) // (2 * per_image))
    hi = max(1, min(batch, max_bm, vmem_cap))
    cands = [d for d in range(1, hi + 1) if batch % d == 0]
    if prefer_multi_step:
        even = [d for d in cands if (batch // d) % 2 == 0]
        ge2 = [d for d in cands if batch // d >= 2]
        pool = even or ge2 or cands
    else:
        pool = cands
    return max(pool)


def conv_patching_forward(x_nchw, conv_w, conv_b, bn_gamma, bn_beta,
                          bn_mean, bn_var, pos_enc, *, eps=1e-5,
                          matmul_dtype=jnp.bfloat16, out_dtype=jnp.bfloat16,
                          block_batch=None):
    """x_nchw: (B, 3, 64, 64) float32 -> (B, 64, 768) `out_dtype`."""
    B, C, H, W = x_nchw.shape
    assert C == IN_CH and H == PATCH * 8 and W == PATCH * 8

    # ---- glue: extract non-overlapping 8x8 patches, feature order (c, kh, kw) ----
    # (matches PyTorch Conv2d weight layout (out, in, kh, kw).flatten -> (768, 192))
    xp = x_nchw.reshape(B, C, H // PATCH, PATCH, W // PATCH, PATCH)   # (B,C,ph,kh,pw,kw)
    xp = jnp.transpose(xp, (0, 2, 4, 1, 3, 5))                        # (B,ph,pw,C,kh,kw)
    patches = xp.reshape(B, NUM_PATCHES, K_FEAT).astype(matmul_dtype) # (B, 64, 192)

    w_mat = conv_w.reshape(EMBED_DIM, K_FEAT).T.astype(matmul_dtype)  # (192, 768)

    # ---- fold conv bias + BatchNorm(eval) into per-channel scale/shift (f32) ----
    inv_std = 1.0 / jnp.sqrt(bn_var + eps)
    scale = (bn_gamma * inv_std).reshape(1, EMBED_DIM).astype(jnp.float32)
    shift = (bn_beta + (conv_b - bn_mean) * bn_gamma * inv_std
             ).reshape(1, EMBED_DIM).astype(jnp.float32)
    pos = pos_enc.reshape(NUM_PATCHES, EMBED_DIM).astype(jnp.float32)

    in_itemsize = jnp.dtype(matmul_dtype).itemsize
    out_itemsize = jnp.dtype(out_dtype).itemsize
    if block_batch is None:
        BM = _pick_bm(B, in_itemsize, out_itemsize,
                      vmem_budget_bytes=VMEM_BLOCK_BUDGET_BYTES,
                      prefer_multi_step=_num_tensorcores_per_device() > 1)
    else:
        BM = block_batch
    assert B % BM == 0, (B, BM)

    flops = 2 * B * NUM_PATCHES * K_FEAT * EMBED_DIM
    bytes_accessed = (B * NUM_PATCHES * K_FEAT * in_itemsize            # patches
                      + K_FEAT * EMBED_DIM * in_itemsize                # weights
                      + (2 + NUM_PATCHES) * EMBED_DIM * 4               # scale/shift/pos
                      + B * NUM_PATCHES * EMBED_DIM * out_itemsize)     # output

    grid_spec = pltpu.PrefetchScalarGridSpec(
        num_scalar_prefetch=0,
        grid=(B // BM,),
        in_specs=[
            pl.BlockSpec((BM, NUM_PATCHES, K_FEAT), lambda b: (b, 0, 0)),
            # Grid-invariant blocks: constant index maps -> resident in VMEM.
            pl.BlockSpec((K_FEAT, EMBED_DIM), lambda b: (0, 0)),
            pl.BlockSpec((1, EMBED_DIM), lambda b: (0, 0)),
            pl.BlockSpec((1, EMBED_DIM), lambda b: (0, 0)),
            pl.BlockSpec((NUM_PATCHES, EMBED_DIM), lambda b: (0, 0)),
        ],
        out_specs=pl.BlockSpec((BM, NUM_PATCHES, EMBED_DIM), lambda b: (b, 0, 0)),
    )

    return pl.pallas_call(
        _patch_embed_kernel,
        out_shape=jax.ShapeDtypeStruct((B, NUM_PATCHES, EMBED_DIM), out_dtype),
        grid_spec=grid_spec,
        compiler_params=pltpu.CompilerParams(
            dimension_semantics=("parallel",),
            vmem_limit_bytes=VMEM_LIMIT_BYTES,
            # Allow XLA to fuse the patch-extraction producer into the call
            # (avoids an extra HBM round trip for `patches` when it fuses).
            allow_input_fusion=[True, False, False, False, False],
        ),
        cost_estimate=pl.CostEstimate(flops=int(flops), transcendentals=0,
                                      bytes_accessed=int(bytes_accessed)),
    )(patches, w_mat, scale, shift, pos)


def _reference(x_nchw, conv_w, conv_b, bn_gamma, bn_beta, bn_mean, bn_var,
               pos_enc, eps=1e-5):
    """Pure-JAX reference using lax.conv (NCHW, OIHW), eval-mode BN."""
    y = jax.lax.conv_general_dilated(
        x_nchw, conv_w, window_strides=(PATCH, PATCH), padding="VALID",
        dimension_numbers=("NCHW", "OIHW", "NCHW"))
    y = y + conv_b[None, :, None, None]
    y = (y - bn_mean[None, :, None, None]) / jnp.sqrt(bn_var + eps)[None, :, None, None]
    y = y * bn_gamma[None, :, None, None] + bn_beta[None, :, None, None]
    y = jnp.maximum(y, 0.0)
    B = y.shape[0]
    y = y.reshape(B, EMBED_DIM, NUM_PATCHES).transpose(0, 2, 1)   # flatten(2).transpose(1,2)
    return y + pos_enc


if __name__ == "__main__":
    key = jax.random.PRNGKey(0)
    k_x, k_w, k_b, k_g, k_beta, k_pos = jax.random.split(key, 6)

    B = 4  # small batch; spatial/channel/embed sizes are fixed by the module
    x = jax.random.normal(k_x, (B, IN_CH, 64, 64), dtype=jnp.float32)

    # Deterministic synthetic parameters (shapes from Conv_patching_dep_2.__init__).
    conv_w = jax.random.normal(k_w, (EMBED_DIM, IN_CH, PATCH, PATCH), jnp.float32) * 0.05
    conv_b = jax.random.normal(k_b, (EMBED_DIM,), jnp.float32) * 0.05
    bn_gamma = 1.0 + 0.1 * jax.random.normal(k_g, (EMBED_DIM,), jnp.float32)
    bn_beta = 0.1 * jax.random.normal(k_beta, (EMBED_DIM,), jnp.float32)
    bn_mean = jnp.zeros((EMBED_DIM,), jnp.float32)   # PyTorch running_mean init
    bn_var = jnp.ones((EMBED_DIM,), jnp.float32)     # PyTorch running_var init
    pos_enc = jax.random.normal(k_pos, (1, NUM_PATCHES, EMBED_DIM), jnp.float32)

    ref = jax.block_until_ready(
        _reference(x, conv_w, conv_b, bn_gamma, bn_beta, bn_mean, bn_var, pos_enc))

    # f32 MXU + f32 output path (exact-semantics check, tight tolerance).
    out_f32 = jax.block_until_ready(
        conv_patching_forward(x, conv_w, conv_b, bn_gamma, bn_beta,
                              bn_mean, bn_var, pos_enc,
                              matmul_dtype=jnp.float32, out_dtype=jnp.float32))
    assert out_f32.shape == (B, NUM_PATCHES, EMBED_DIM), out_f32.shape
    assert jnp.allclose(out_f32, ref, atol=1e-3, rtol=1e-3), \
        float(jnp.abs(out_f32 - ref).max())

    # Default production path: bf16 MXU inputs + bf16 output, f32 accumulation.
    out_bf16 = jax.block_until_ready(
        conv_patching_forward(x, conv_w, conv_b, bn_gamma, bn_beta,
                              bn_mean, bn_var, pos_enc))
    assert out_bf16.shape == (B, NUM_PATCHES, EMBED_DIM), out_bf16.shape
    assert out_bf16.dtype == jnp.bfloat16, out_bf16.dtype
    assert jnp.allclose(out_bf16.astype(jnp.float32), ref, atol=7e-2, rtol=5e-2), \
        float(jnp.abs(out_bf16.astype(jnp.float32) - ref).max())

    print("KERNEL_OK")
</pallas_src>

<mosaic_0001>
module attributes {stable_mosaic.version = 11 : i64} {
  func.func @_patch_embed_kernel(%arg0: i32, %arg1: memref<4x64x192xf32, #tpu.memory_space<vmem>>, %arg2: memref<192x768xf32, #tpu.memory_space<vmem>>, %arg3: memref<1x768xf32, #tpu.memory_space<vmem>>, %arg4: memref<1x768xf32, #tpu.memory_space<vmem>>, %arg5: memref<64x768xf32, #tpu.memory_space<vmem>>, %arg6: memref<4x64x768xf32, #tpu.memory_space<vmem>>) attributes {dimension_semantics = [#tpu.dimension_semantics<parallel>], iteration_bounds = array<i64: 1>, scalar_prefetch = 0 : i64, scratch_operands = 0 : i64, tpu.core_type = #tpu.core_type<tc>, window_params = [{transform_indices = @transform_0, window_bounds = array<i64: 4, 64, 192>}, {pipeline_mode = #tpu.pipeline_mode<synchronous>, transform_indices = @transform_1, window_bounds = array<i64: 192, 768>}, {pipeline_mode = #tpu.pipeline_mode<synchronous>, transform_indices = @transform_2, window_bounds = array<i64: 1, 768>}, {pipeline_mode = #tpu.pipeline_mode<synchronous>, transform_indices = @transform_3, window_bounds = array<i64: 1, 768>}, {pipeline_mode = #tpu.pipeline_mode<synchronous>, transform_indices = @transform_4, window_bounds = array<i64: 64, 768>}, {transform_indices = @transform_5, window_bounds = array<i64: 4, 64, 768>}]} {
    %c0 = arith.constant 0 : index
    %c0_0 = arith.constant 0 : index
    %c0_1 = arith.constant 0 : index
    %0 = vector.load %arg1[%c0, %c0_0, %c0_1] : memref<4x64x192xf32, #tpu.memory_space<vmem>>, vector<4x64x192xf32>
    %1 = vector.shape_cast %0 : vector<4x64x192xf32> to vector<256x192xf32>
    %c0_2 = arith.constant 0 : index
    %c0_3 = arith.constant 0 : index
    %2 = vector.load %arg2[%c0_2, %c0_3] : memref<192x768xf32, #tpu.memory_space<vmem>>, vector<192x768xf32>
    %cst = arith.constant dense<0.000000e+00> : vector<256x768xf32>
    %3 = tpu.matmul %1, %2, %cst {dimension_numbers = #tpu.dot_dimension_numbers<[1], [0], [0], [1], [0, 0, 1, 1], [], []>} : vector<256x192xf32>, vector<192x768xf32>, vector<256x768xf32> -> vector<256x768xf32>
    %c0_4 = arith.constant 0 : index
    %c0_5 = arith.constant 0 : index
    %4 = vector.load %arg3[%c0_4, %c0_5] : memref<1x768xf32, #tpu.memory_space<vmem>>, vector<1x768xf32>
    %5 = vector.broadcast %4 : vector<1x768xf32> to vector<256x768xf32>
    %6 = arith.mulf %3, %5 : vector<256x768xf32>
    %c0_6 = arith.constant 0 : index
    %c0_7 = arith.constant 0 : index
    %7 = vector.load %arg4[%c0_6, %c0_7] : memref<1x768xf32, #tpu.memory_space<vmem>>, vector<1x768xf32>
    %8 = vector.broadcast %7 : vector<1x768xf32> to vector<256x768xf32>
    %9 = arith.addf %6, %8 : vector<256x768xf32>
    %cst_8 = arith.constant 0.000000e+00 : f32
    %10 = vector.broadcast %cst_8 : f32 to vector<256x768xf32>
    %11 = arith.maximumf %9, %10 : vector<256x768xf32>
    %12 = vector.shape_cast %11 : vector<256x768xf32> to vector<4x64x768xf32>
    %c0_9 = arith.constant 0 : index
    %c0_10 = arith.constant 0 : index
    %13 = vector.load %arg5[%c0_9, %c0_10] : memref<64x768xf32, #tpu.memory_space<vmem>>, vector<64x768xf32>
    %14 = vector.shape_cast %13 : vector<64x768xf32> to vector<1x64x768xf32>
    %15 = vector.broadcast %14 : vector<1x64x768xf32> to vector<4x64x768xf32>
    %16 = arith.addf %12, %15 : vector<4x64x768xf32>
    %c0_11 = arith.constant 0 : index
    %c0_12 = arith.constant 0 : index
    %c0_13 = arith.constant 0 : index
    %17 = vector.load %arg6[%c0_11, %c0_12, %c0_13] : memref<4x64x768xf32, #tpu.memory_space<vmem>>, vector<4x64x768xf32>
    tpu.vector_store %arg6[%c0_11, %c0_12, %c0_13], %16 {strides = array<i32>} : memref<4x64x768xf32, #tpu.memory_space<vmem>>, vector<4x64x768xf32>,
    return
  }
  func.func @transform_0(%arg0: i32) -> (i32, i32, i32) {
    %c0_i32 = arith.constant 0 : i32
    %c0_i32_0 = arith.constant 0 : i32
    %c0_i32_1 = arith.constant 0 : i32
    return %arg0, %c0_i32, %c0_i32_0 : i32, i32, i32
  }
  func.func @transform_1(%arg0: i32) -> (i32, i32) {
    %c0_i32 = arith.constant 0 : i32
    %c0_i32_0 = arith.constant 0 : i32
    %c0_i32_1 = arith.constant 0 : i32
    return %c0_i32, %c0_i32_0 : i32, i32
  }
  func.func @transform_2(%arg0: i32) -> (i32, i32) {
    %c0_i32 = arith.constant 0 : i32
    %c0_i32_0 = arith.constant 0 : i32
    %c0_i32_1 = arith.constant 0 : i32
    return %c0_i32, %c0_i32_0 : i32, i32
  }
  func.func @transform_3(%arg0: i32) -> (i32, i32) {
    %c0_i32 = arith.constant 0 : i32
    %c0_i32_0 = arith.constant 0 : i32
    %c0_i32_1 = arith.constant 0 : i32
    return %c0_i32, %c0_i32_0 : i32, i32
  }
  func.func @transform_4(%arg0: i32) -> (i32, i32) {
    %c0_i32 = arith.constant 0 : i32
    %c0_i32_0 = arith.constant 0 : i32
    %c0_i32_1 = arith.constant 0 : i32
    return %c0_i32, %c0_i32_0 : i32, i32
  }
  func.func @transform_5(%arg0: i32) -> (i32, i32, i32) {
    %c0_i32 = arith.constant 0 : i32
    %c0_i32_0 = arith.constant 0 : i32
    %c0_i32_1 = arith.constant 0 : i32
    return %arg0, %c0_i32, %c0_i32_0 : i32, i32, i32
  }
}

</mosaic_0001>

<llo_original>
// kernel: tpu_custom_call.1
$region0: #{tpu_custom_call.1}
  #allocation0 [shape = 'u32[]', space=smem, size = 0x4, offset = 0x4, fixed_abs, tag = 'smem constant byte address 0x4 - core index']
  #allocation1 [shape = 'u32[144,128]{1,0:T(1,128)}', space=vmem, size = 0x12000, scoped, tag = 'internal scratch']
  %s0 = inlined_call_operand.hbm [shape: f32[4,64,192], index: 0, kind: input, shape index: {}]
  %s1 = inlined_call_operand.hbm [shape: f32[192,768], index: 1, kind: input, shape index: {}]
  %s2 = inlined_call_operand.hbm [shape: f32[1,768], index: 2, kind: input, shape index: {}]
  %s3 = inlined_call_operand.hbm [shape: f32[1,768], index: 3, kind: input, shape index: {}]
  %s4 = inlined_call_operand.hbm [shape: f32[64,768], index: 4, kind: input, shape index: {}]
  %s5 = inlined_call_operand.hbm [shape: f32[4,64,768], index: 5, kind: output, shape index: {}]
  %s6 = sld [smem:[#allocation0]]
  $region50: #{tpu_custom_call.1} parent=0
    _
  %s8 = ssub.s32 1, %s6
  %s9 = scalar_select 0, %s8, %s6
  $region1: #{tpu_custom_call.1} parent=0
    #allocation2 [shape = 'u8[262144]{0}', space=vmem, size = 0x40000, scoped, tag = 'input window, operand 0, single buffered']
    #allocation3 [shape = 's32[1]{0}', space=sflag, size = 0x4, scoped, tag = 'scoped memory for tpu_custom_call.1']
    #allocation4 [shape = 's32[1]{0}', space=sflag, size = 0x4, scoped, tag = 'scoped memory for tpu_custom_call.1']
    #allocation5 [shape = 'u8[589824]{0}', space=vmem, size = 0x90000, scoped, tag = 'input window, operand 1, single buffered']
    #allocation6 [shape = 's32[1]{0}', space=sflag, size = 0x4, scoped, tag = 'scoped memory for tpu_custom_call.1']
    #allocation7 [shape = 'u8[3072]{0}', space=vmem, size = 0xc00, scoped, tag = 'input window, operand 2, single buffered']
    #allocation8 [shape = 'u8[3072]{0}', space=vmem, size = 0xc00, scoped, tag = 'input window, operand 3, single buffered']
    #allocation9 [shape = 's32[1]{0}', space=sflag, size = 0x4, scoped, tag = 'scoped memory for tpu_custom_call.1']
    #allocation10 [shape = 'u8[196608]{0}', space=vmem, size = 0x30000, scoped, tag = 'input window, operand 4, single buffered']
    #allocation11 [shape = 'u8[786432]{0}', space=vmem, size = 0xc0000, scoped, tag = 'output window, operand 0, single buffered']
    %10 = vsyncpa [#allocation3], 0
    %11 = vsyncpa [#allocation6], 0
    %12 = vsyncpa [#allocation9], 0
    %13 = vsyncpa [#allocation4], 0
    // Predicated region
    $region2: #{tpu_custom_call.1} parent=1 // pred_check
      _
    $region3: #{tpu_custom_call.1} parent=1 // pred_check_branch
      %15 = sbr.rel (0) target = $region5
    $region4: #{tpu_custom_call.1} parent=1 // pred_region
      %s17 = ssub.s32 8192, 8192
      %18 = vsyncadd [#allocation3], %s17
      %s19 = sshll.u32 [#allocation2], 4
      %s20 = int_to_ptr.vmem [resolvable:$true] %s19
      %25 = dma.hbm_to_vmem [thread:$0]  %s0, 8192, %s20, [#allocation3], 256, 256, 16
    $region5: #{tpu_custom_call.1} parent=1 // pred_fallthru
      _
    // Predicated region
    $region6: #{tpu_custom_call.1} parent=1 // pred_check
      _
    $region7: #{tpu_custom_call.1} parent=1 // pred_check_branch
      %27 = sbr.rel (0) target = $region9
    $region8: #{tpu_custom_call.1} parent=1 // pred_region
      %s29 = ssub.s32 18432, 18432
      %30 = vsyncadd [#allocation6], %s29
      %s31 = sshll.u32 [#allocation5], 4
      %s32 = int_to_ptr.vmem [resolvable:$true] %s31
      %37 = dma.hbm_to_vmem [thread:$0]  %s1, 18432, %s32, [#allocation6], 768, 768, 48
    $region9: #{tpu_custom_call.1} parent=1 // pred_fallthru
      _
    // Predicated region
    $region10: #{tpu_custom_call.1} parent=1 // pred_check
      _
    $region11: #{tpu_custom_call.1} parent=1 // pred_check_branch
      %39 = sbr.rel (0) target = $region13
    $region12: #{tpu_custom_call.1} parent=1 // pred_region
      %s41 = ssub.s32 96, 96
      %42 = vsyncadd [#allocation6], %s41
      %s44 = sshll.u32 [#allocation7], 4
      %s45 = int_to_ptr.vmem [resolvable:$true] %s44
      %47 = dma.hbm_to_vmem [thread:$0]  %s2, 96, %s45, [#allocation6]
    $region13: #{tpu_custom_call.1} parent=1 // pred_fallthru
      _
    // Predicated region
    $region14: #{tpu_custom_call.1} parent=1 // pred_check
      _
    $region15: #{tpu_custom_call.1} parent=1 // pred_check_branch
      %49 = sbr.rel (0) target = $region17
    $region16: #{tpu_custom_call.1} parent=1 // pred_region
      %s51 = ssub.s32 96, 96
      %52 = vsyncadd [#allocation9], %s51
      %s54 = sshll.u32 [#allocation8], 4
      %s55 = int_to_ptr.vmem [resolvable:$true] %s54
      %57 = dma.hbm_to_vmem [thread:$0]  %s3, 96, %s55, [#allocation9]
    $region17: #{tpu_custom_call.1} parent=1 // pred_fallthru
      _
    // Predicated region
    $region18: #{tpu_custom_call.1} parent=1 // pred_check
      _
    $region19: #{tpu_custom_call.1} parent=1 // pred_check_branch
      %59 = sbr.rel (0) target = $region21
    $region20: #{tpu_custom_call.1} parent=1 // pred_region
      %s61 = ssub.s32 6144, 6144
      %62 = vsyncadd [#allocation9], %s61
      %s63 = sshll.u32 [#allocation10], 4
      %s64 = int_to_ptr.vmem [resolvable:$true] %s63
      %69 = dma.hbm_to_vmem [thread:$0]  %s4, 6144, %s64, [#allocation9], 768, 768, 48
    $region21: #{tpu_custom_call.1} parent=1 // pred_fallthru
      _
    // Predicated region
    $region22: #{tpu_custom_call.1} parent=1 // pred_check
      _
    $region23: #{tpu_custom_call.1} parent=1 // pred_check_branch
      %71 = sbr.rel (0) target = $region25
    $region24: #{tpu_custom_call.1} parent=1 // pred_region
      %72 = dma.done [#allocation3], 8192
    $region25: #{tpu_custom_call.1} parent=1 // pred_fallthru
      _
    // Predicated region
    $region26: #{tpu_custom_call.1} parent=1 // pred_check
      _
    $region27: #{tpu_custom_call.1} parent=1 // pred_check_branch
      %74 = sbr.rel (0) target = $region29
    $region28: #{tpu_custom_call.1} parent=1 // pred_region
      %75 = dma.done [#allocation6], 18432
    $region29: #{tpu_custom_call.1} parent=1 // pred_fallthru
      _
    // Predicated region
    $region30: #{tpu_custom_call.1} parent=1 // pred_check
      _
    $region31: #{tpu_custom_call.1} parent=1 // pred_check_branch
      %77 = sbr.rel (0) target = $region33
    $region32: #{tpu_custom_call.1} parent=1 // pred_region
      %78 = dma.done [#allocation6], 96
    $region33: #{tpu_custom_call.1} parent=1 // pred_fallthru
      _
    // Predicated region
    $region34: #{tpu_custom_call.1} parent=1 // pred_check
      _
    $region35: #{tpu_custom_call.1} parent=1 // pred_check_branch
      %80 = sbr.rel (0) target = $region37
    $region36: #{tpu_custom_call.1} parent=1 // pred_region
      %81 = dma.done [#allocation9], 96
    $region37: #{tpu_custom_call.1} parent=1 // pred_fallthru
      _
    // Predicated region
    $region38: #{tpu_custom_call.1} parent=1 // pred_check
      _
    $region39: #{tpu_custom_call.1} parent=1 // pred_check_branch
      %83 = sbr.rel (0) target = $region41
    $region40: #{tpu_custom_call.1} parent=1 // pred_region
      %84 = dma.done [#allocation9], 6144
    $region41: #{tpu_custom_call.1} parent=1 // pred_fallthru
      _
    %v85 = vld [vmem:[#allocation2] sm:$0xff]
    %v86 = vld [vmem:[#allocation2 + $0x8] sm:$0xff]
    %v87 = vld [vmem:[#allocation2 + $0x10] sm:$0xff]
    %v88 = vld [vmem:[#allocation2 + $0x18] sm:$0xff]
    %v89 = vld [vmem:[#allocation2 + $0x20] sm:$0xff]
    %v90 = vld [vmem:[#allocation2 + $0x28] sm:$0xff]
    %v91 = vld [vmem:[#allocation2 + $0x30] sm:$0xff]
    %v92 = vld [vmem:[#allocation2 + $0x38] sm:$0xff]
    %v93 = vld [vmem:[#allocation2 + $0x40] sm:$0xff]
    %v94 = vld [vmem:[#allocation2 + $0x48] sm:$0xff]
    %v95 = vld [vmem:[#allocation2 + $0x50] sm:$0xff]
    %v96 = vld [vmem:[#allocation2 + $0x58] sm:$0xff]
    %v97 = vld [vmem:[#allocation2 + $0x60] sm:$0xff]
    %v98 = vld [vmem:[#allocation2 + $0x68] sm:$0xff]
    %v99 = vld [vmem:[#allocation2 + $0x70] sm:$0xff]
    %v100 = vld [vmem:[#allocation2 + $0x78] sm:$0xff]
    %v101 = vld [vmem:[#allocation2 + $0x80] sm:$0xff]
    %v102 = vld [vmem:[#allocation2 + $0x88] sm:$0xff]
    %v103 = vld [vmem:[#allocation2 + $0x90] sm:$0xff]
    %v104 = vld [vmem:[#allocation2 + $0x98] sm:$0xff]
    %v105 = vld [vmem:[#allocation2 + $0xa0] sm:$0xff]
    %v106 = vld [vmem:[#allocation2 + $0xa8] sm:$0xff]
    %v107 = vld [vmem:[#allocation2 + $0xb0] sm:$0xff]
    %v108 = vld [vmem:[#allocation2 + $0xb8] sm:$0xff]
    %v109 = vld [vmem:[#allocation2 + $0xc0] sm:$0xff]
    %v110 = vld [vmem:[#allocation2 + $0xc8] sm:$0xff]
    %v111 = vld [vmem:[#allocation2 + $0xd0] sm:$0xff]
    %v112 = vld [vmem:[#allocation2 + $0xd8] sm:$0xff]
    %v113 = vld [vmem:[#allocation2 + $0xe0] sm:$0xff]
    %v114 = vld [vmem:[#allocation2 + $0xe8] sm:$0xff]
    %v115 = vld [vmem:[#allocation2 + $0xf0] sm:$0xff]
    %v116 = vld [vmem:[#allocation2 + $0xf8] sm:$0xff]
    %v117 = vld [vmem:[#allocation2 + $0x100] sm:$0xff]
    %v118 = vld [vmem:[#allocation2 + $0x108] sm:$0xff]
    %v119 = vld [vmem:[#allocation2 + $0x110] sm:$0xff]
    %v120 = vld [vmem:[#allocation2 + $0x118] sm:$0xff]
    %v121 = vld [vmem:[#allocation2 + $0x120] sm:$0xff]
    %v122 = vld [vmem:[#allocation2 + $0x128] sm:$0xff]
    %v123 = vld [vmem:[#allocation2 + $0x130] sm:$0xff]
    %v124 = vld [vmem:[#allocation2 + $0x138] sm:$0xff]
    %v125 = vld [vmem:[#allocation2 + $0x140] sm:$0xff]
    %v126 = vld [vmem:[#allocation2 + $0x148] sm:$0xff]
    %v127 = vld [vmem:[#allocation2 + $0x150] sm:$0xff]
    %v128 = vld [vmem:[#allocation2 + $0x158] sm:$0xff]
    %v129 = vld [vmem:[#allocation2 + $0x160] sm:$0xff]
    %v130 = vld [vmem:[#allocation2 + $0x168] sm:$0xff]
    %v131 = vld [vmem:[#allocation2 + $0x170] sm:$0xff]
    %v132 = vld [vmem:[#allocation2 + $0x178] sm:$0xff]
    %v133 = vld [vmem:[#allocation2 + $0x180] sm:$0xff]
    %v134 = vld [vmem:[#allocation2 + $0x188] sm:$0xff]
    %v135 = vld [vmem:[#allocation2 + $0x190] sm:$0xff]
    %v136 = vld [vmem:[#allocation2 + $0x198] sm:$0xff]
    %v137 = vld [vmem:[#allocation2 + $0x1a0] sm:$0xff]
    %v138 = vld [vmem:[#allocation2 + $0x1a8] sm:$0xff]
    %v139 = vld [vmem:[#allocation2 + $0x1b0] sm:$0xff]
    %v140 = vld [vmem:[#allocation2 + $0x1b8] sm:$0xff]
    %v141 = vld [vmem:[#allocation2 + $0x1c0] sm:$0xff]
    %v142 = vld [vmem:[#allocation2 + $0x1c8] sm:$0xff]
    %v143 = vld [vmem:[#allocation2 + $0x1d0] sm:$0xff]
    %v144 = vld [vmem:[#allocation2 + $0x1d8] sm:$0xff]
    %v145 = vld [vmem:[#allocation2 + $0x1e0] sm:$0xff]
    %v146 = vld [vmem:[#allocation2 + $0x1e8] sm:$0xff]
    %v147 = vld [vmem:[#allocation2 + $0x1f0] sm:$0xff]
    %v148 = vld [vmem:[#allocation2 + $0x1f8] sm:$0xff]
    %v149 = vld [vmem:[#allocation5] sm:$0xff]
    %v150 = vld [vmem:[#allocation5 + $0x8] sm:$0xff]
    %v151 = vld [vmem:[#allocation5 + $0x10] sm:$0xff]
    %v152 = vld [vmem:[#allocation5 + $0x18] sm:$0xff]
    %v153 = vld [vmem:[#allocation5 + $0x20] sm:$0xff]
    %v154 = vld [vmem:[#allocation5 + $0x28] sm:$0xff]
    %v155 = vld [vmem:[#allocation5 + $0x30] sm:$0xff]
    %v156 = vld [vmem:[#allocation5 + $0x38] sm:$0xff]
    %v157 = vld [vmem:[#allocation5 + $0x40] sm:$0xff]
    %v158 = vld [vmem:[#allocation5 + $0x48] sm:$0xff]
    %v159 = vld [vmem:[#allocation5 + $0x50] sm:$0xff]
    %v160 = vld [vmem:[#allocation5 + $0x58] sm:$0xff]
    %v161 = vld [vmem:[#allocation5 + $0x60] sm:$0xff]
    %v162 = vld [vmem:[#allocation5 + $0x68] sm:$0xff]
    %v163 = vld [vmem:[#allocation5 + $0x70] sm:$0xff]
    %v164 = vld [vmem:[#allocation5 + $0x78] sm:$0xff]
    %v165 = vld [vmem:[#allocation5 + $0x80] sm:$0xff]
    %v166 = vld [vmem:[#allocation5 + $0x88] sm:$0xff]
    %v167 = vld [vmem:[#allocation5 + $0x90] sm:$0xff]
    %v168 = vld [vmem:[#allocation5 + $0x98] sm:$0xff]
    %v169 = vld [vmem:[#allocation5 + $0xa0] sm:$0xff]
    %v170 = vld [vmem:[#allocation5 + $0xa8] sm:$0xff]
    %v171 = vld [vmem:[#allocation5 + $0xb0] sm:$0xff]
    %v172 = vld [vmem:[#allocation5 + $0xb8] sm:$0xff]
    %v173 = vld [vmem:[#allocation5 + $0xc0] sm:$0xff]
    %v174 = vld [vmem:[#allocation5 + $0xc8] sm:$0xff]
    %v175 = vld [vmem:[#allocation5 + $0xd0] sm:$0xff]
    %v176 = vld [vmem:[#allocation5 + $0xd8] sm:$0xff]
    %v177 = vld [vmem:[#allocation5 + $0xe0] sm:$0xff]
    %v178 = vld [vmem:[#allocation5 + $0xe8] sm:$0xff]
    %v179 = vld [vmem:[#allocation5 + $0xf0] sm:$0xff]
    %v180 = vld [vmem:[#allocation5 + $0xf8] sm:$0xff]
    %v181 = vld [vmem:[#allocation5 + $0x100] sm:$0xff]
    %v182 = vld [vmem:[#allocation5 + $0x108] sm:$0xff]
    %v183 = vld [vmem:[#allocation5 + $0x110] sm:$0xff]
    %v184 = vld [vmem:[#allocation5 + $0x118] sm:$0xff]
    %v185 = vld [vmem:[#allocation5 + $0x120] sm:$0xff]
    %v186 = vld [vmem:[#allocation5 + $0x128] sm:$0xff]
    %v187 = vld [vmem:[#allocation5 + $0x130] sm:$0xff]
    %v188 = vld [vmem:[#allocation5 + $0x138] sm:$0xff]
    %v189 = vld [vmem:[#allocation5 + $0x140] sm:$0xff]
    %v190 = vld [vmem:[#allocation5 + $0x148] sm:$0xff]
    %v191 = vld [vmem:[#allocation5 + $0x150] sm:$0xff]
    %v192 = vld [vmem:[#allocation5 + $0x158] sm:$0xff]
    %v193 = vld [vmem:[#allocation5 + $0x160] sm:$0xff]
    %v194 = vld [vmem:[#allocation5 + $0x168] sm:$0xff]
    %v195 = vld [vmem:[#allocation5 + $0x170] sm:$0xff]
    %v196 = vld [vmem:[#allocation5 + $0x178] sm:$0xff]
    %v197 = vld [vmem:[#allocation5 + $0x180] sm:$0xff]
    %v198 = vld [vmem:[#allocation5 + $0x188] sm:$0xff]
    %v199 = vld [vmem:[#allocation5 + $0x190] sm:$0xff]
    %v200 = vld [vmem:[#allocation5 + $0x198] sm:$0xff]
    %v201 = vld [vmem:[#allocation5 + $0x1a0] sm:$0xff]
    %v202 = vld [vmem:[#allocation5 + $0x1a8] sm:$0xff]
    %v203 = vld [vmem:[#allocation5 + $0x1b0] sm:$0xff]
    %v204 = vld [vmem:[#allocation5 + $0x1b8] sm:$0xff]
    %v205 = vld [vmem:[#allocation5 + $0x1c0] sm:$0xff]
    %v206 = vld [vmem:[#allocation5 + $0x1c8] sm:$0xff]
    %v207 = vld [vmem:[#allocation5 + $0x1d0] sm:$0xff]
    %v208 = vld [vmem:[#allocation5 + $0x1d8] sm:$0xff]
    %v209 = vld [vmem:[#allocation5 + $0x1e0] sm:$0xff]
    %v210 = vld [vmem:[#allocation5 + $0x1e8] sm:$0xff]
    %v211 = vld [vmem:[#allocation5 + $0x1f0] sm:$0xff]
    %v212 = vld [vmem:[#allocation5 + $0x1f8] sm:$0xff]
    %v213 = vld [vmem:[#allocation5 + $0x200] sm:$0xff]
    %v214 = vld [vmem:[#allocation5 + $0x208] sm:$0xff]
    %v215 = vld [vmem:[#allocation5 + $0x210] sm:$0xff]
    %v216 = vld [vmem:[#allocation5 + $0x218] sm:$0xff]
    %v217 = vld [vmem:[#allocation5 + $0x220] sm:$0xff]
    %v218 = vld [vmem:[#allocation5 + $0x228] sm:$0xff]
    %v219 = vld [vmem:[#allocation5 + $0x230] sm:$0xff]
    %v220 = vld [vmem:[#allocation5 + $0x238] sm:$0xff]
    %v221 = vld [vmem:[#allocation5 + $0x240] sm:$0xff]
    %v222 = vld [vmem:[#allocation5 + $0x248] sm:$0xff]
    %v223 = vld [vmem:[#allocation5 + $0x250] sm:$0xff]
    %v224 = vld [vmem:[#allocation5 + $0x258] sm:$0xff]
    %v225 = vld [vmem:[#allocation5 + $0x260] sm:$0xff]
    %v226 = vld [vmem:[#allocation5 + $0x268] sm:$0xff]
    %v227 = vld [vmem:[#allocation5 + $0x270] sm:$0xff]
    %v228 = vld [vmem:[#allocation5 + $0x278] sm:$0xff]
    %v229 = vld [vmem:[#allocation5 + $0x280] sm:$0xff]
    %v230 = vld [vmem:[#allocation5 + $0x288] sm:$0xff]
    %v231 = vld [vmem:[#allocation5 + $0x290] sm:$0xff]
    %v232 = vld [vmem:[#allocation5 + $0x298] sm:$0xff]
    %v233 = vld [vmem:[#allocation5 + $0x2a0] sm:$0xff]
    %v234 = vld [vmem:[#allocation5 + $0x2a8] sm:$0xff]
    %v235 = vld [vmem:[#allocation5 + $0x2b0] sm:$0xff]
    %v236 = vld [vmem:[#allocation5 + $0x2b8] sm:$0xff]
    %v237 = vld [vmem:[#allocation5 + $0x2c0] sm:$0xff]
    %v238 = vld [vmem:[#allocation5 + $0x2c8] sm:$0xff]
    %v239 = vld [vmem:[#allocation5 + $0x2d0] sm:$0xff]
    %v240 = vld [vmem:[#allocation5 + $0x2d8] sm:$0xff]
    %v241 = vld [vmem:[#allocation5 + $0x2e0] sm:$0xff]
    %v242 = vld [vmem:[#allocation5 + $0x2e8] sm:$0xff]
    %v243 = vld [vmem:[#allocation5 + $0x2f0] sm:$0xff]
    %v244 = vld [vmem:[#allocation5 + $0x2f8] sm:$0xff]
    %v245 = vld [vmem:[#allocation5 + $0x300] sm:$0xff]
    %v246 = vld [vmem:[#allocation5 + $0x308] sm:$0xff]
    %v247 = vld [vmem:[#allocation5 + $0x310] sm:$0xff]
    %v248 = vld [vmem:[#allocation5 + $0x318] sm:$0xff]
    %v249 = vld [vmem:[#allocation5 + $0x320] sm:$0xff]
    %v250 = vld [vmem:[#allocation5 + $0x328] sm:$0xff]
    %v251 = vld [vmem:[#allocation5 + $0x330] sm:$0xff]
    %v252 = vld [vmem:[#allocation5 + $0x338] sm:$0xff]
    %v253 = vld [vmem:[#allocation5 + $0x340] sm:$0xff]
    %v254 = vld [vmem:[#allocation5 + $0x348] sm:$0xff]
    %v255 = vld [vmem:[#allocation5 + $0x350] sm:$0xff]
    %v256 = vld [vmem:[#allocation5 + $0x358] sm:$0xff]
    %v257 = vld [vmem:[#allocation5 + $0x360] sm:$0xff]
    %v258 = vld [vmem:[#allocation5 + $0x368] sm:$0xff]
    %v259 = vld [vmem:[#allocation5 + $0x370] sm:$0xff]
    %v260 = vld [vmem:[#allocation5 + $0x378] sm:$0xff]
    %v261 = vld [vmem:[#allocation5 + $0x380] sm:$0xff]
    %v262 = vld [vmem:[#allocation5 + $0x388] sm:$0xff]
    %v263 = vld [vmem:[#allocation5 + $0x390] sm:$0xff]
    %v264 = vld [vmem:[#allocation5 + $0x398] sm:$0xff]
    %v265 = vld [vmem:[#allocation5 + $0x3a0] sm:$0xff]
    %v266 = vld [vmem:[#allocation5 + $0x3a8] sm:$0xff]
    %v267 = vld [vmem:[#allocation5 + $0x3b0] sm:$0xff]
    %v268 = vld [vmem:[#allocation5 + $0x3b8] sm:$0xff]
    %v269 = vld [vmem:[#allocation5 + $0x3c0] sm:$0xff]
    %v270 = vld [vmem:[#allocation5 + $0x3c8] sm:$0xff]
    %v271 = vld [vmem:[#allocation5 + $0x3d0] sm:$0xff]
    %v272 = vld [vmem:[#allocation5 + $0x3d8] sm:$0xff]
    %v273 = vld [vmem:[#allocation5 + $0x3e0] sm:$0xff]
    %v274 = vld [vmem:[#allocation5 + $0x3e8] sm:$0xff]
    %v275 = vld [vmem:[#allocation5 + $0x3f0] sm:$0xff]
    %v276 = vld [vmem:[#allocation5 + $0x3f8] sm:$0xff]
    %v277 = vld [vmem:[#allocation5 + $0x400] sm:$0xff]
    %v278 = vld [vmem:[#allocation5 + $0x408] sm:$0xff]
    %v279 = vld [vmem:[#allocation5 + $0x410] sm:$0xff]
    %v280 = vld [vmem:[#allocation5 + $0x418] sm:$0xff]
    %v281 = vld [vmem:[#allocation5 + $0x420] sm:$0xff]
    %v282 = vld [vmem:[#allocation5 + $0x428] sm:$0xff]
    %v283 = vld [vmem:[#allocation5 + $0x430] sm:$0xff]
    %v284 = vld [vmem:[#allocation5 + $0x438] sm:$0xff]
    %v285 = vld [vmem:[#allocation5 + $0x440] sm:$0xff]
    %v286 = vld [vmem:[#allocation5 + $0x448] sm:$0xff]
    %v287 = vld [vmem:[#allocation5 + $0x450] sm:$0xff]
    %v288 = vld [vmem:[#allocation5 + $0x458] sm:$0xff]
    %v289 = vld [vmem:[#allocation5 + $0x460] sm:$0xff]
    %v290 = vld [vmem:[#allocation5 + $0x468] sm:$0xff]
    %v291 = vld [vmem:[#allocation5 + $0x470] sm:$0xff]
    %v292 = vld [vmem:[#allocation5 + $0x478] sm:$0xff]
    %vm293 = vcmask 523264
    %v295 = vsel %vm293, %v86, 0
    %v298 = vsel %vm293, %v88, 0
    %v301 = vsel %vm293, %v90, 0
    %v304 = vsel %vm293, %v92, 0
    %v307 = vsel %vm293, %v94, 0
    %v310 = vsel %vm293, %v96, 0
    %v313 = vsel %vm293, %v98, 0
    %v316 = vsel %vm293, %v100, 0
    %v319 = vsel %vm293, %v102, 0
    %v322 = vsel %vm293, %v104, 0
    %v325 = vsel %vm293, %v106, 0
    %v328 = vsel %vm293, %v108, 0
    %v331 = vsel %vm293, %v110, 0
    %v334 = vsel %vm293, %v112, 0
    %v337 = vsel %vm293, %v114, 0
    %v340 = vsel %vm293, %v116, 0
    %v343 = vsel %vm293, %v118, 0
    %v346 = vsel %vm293, %v120, 0
    %v349 = vsel %vm293, %v122, 0
    %v352 = vsel %vm293, %v124, 0
    %v355 = vsel %vm293, %v126, 0
    %v358 = vsel %vm293, %v128, 0
    %v361 = vsel %vm293, %v130, 0
    %v364 = vsel %vm293, %v132, 0
    %v367 = vsel %vm293, %v134, 0
    %v370 = vsel %vm293, %v136, 0
    %v373 = vsel %vm293, %v138, 0
    %v376 = vsel %vm293, %v140, 0
    %v379 = vsel %vm293, %v142, 0
    %v382 = vsel %vm293, %v144, 0
    %v385 = vsel %vm293, %v146, 0
    %v388 = vsel %vm293, %v148, 0
    %390 = vmatprep.subr.mxu0 %v240
    %391 = vmatpush1.msra.mxu0 %v239
    %392 = vmatprep.subr.mxu0 %v234
    %393 = vmatpush1.msra.mxu0 %v233
    %394 = vmatprep.subr.mxu0 %v228
    %395 = vmatpush1.msra.mxu0 %v227
    %396 = vmatprep.subr.mxu0 %v222
    %397 = vmatpush1.msra.mxu0 %v221
    %398 = vmatprep.subr.mxu0 %v216
    %399 = vmatpush1.msra.mxu0 %v215
    %400 = vmatprep.subr.mxu0 %v210
    %401 = vmatpush1.msra.mxu0 %v209
    %402 = vmatprep.subr.mxu0 %v204
    %403 = vmatpush1.msra.mxu0 %v203
    %404 = vmatprep.subr.mxu0 %v198
    %405 = vmatpush1.msra.mxu0 %v197
    %406 = vmatprep.subr.mxu0 %v192
    %407 = vmatpush1.msra.mxu0 %v191
    %408 = vmatprep.subr.mxu0 %v186
    %409 = vmatpush1.msra.mxu0 %v185
    %410 = vmatprep.subr.mxu0 %v180
    %411 = vmatpush1.msra.mxu0 %v179
    %412 = vmatprep.subr.mxu0 %v174
    %413 = vmatpush1.msra.mxu0 %v173
    %414 = vmatprep.subr.mxu0 %v168
    %415 = vmatpush1.msra.mxu0 %v167
    %416 = vmatprep.subr.mxu0 %v162
    %417 = vmatpush1.msra.mxu0 %v161
    %418 = vmatprep.subr.mxu0 %v156
    %419 = vmatpush1.msra.mxu0 %v155
    %420 = vmatprep.subr.mxu0 %v150
    %421 = vmatpush1.msra.mxu0 %v149
    %422 = vmatprep.subr.mxu0 0.0
    %423 = vmatpush2.msra.mxu0 0.0
    %424 = vmatprep.subr.mxu0 0.0
    %425 = vmatpush2.msra.mxu0 0.0
    %426 = vmatprep.subr.mxu0 0.0
    %427 = vmatpush2.msra.mxu0 0.0
    %428 = vmatprep.subr.mxu0 0.0
    %429 = vmatpush2.msra.mxu0 0.0
    %430 = vmatprep.subr.mxu0 0.0
    %431 = vmatpush2.msra.mxu0 0.0
    %432 = vmatprep.subr.mxu0 0.0
    %433 = vmatpush2.msra.mxu0 0.0
    %434 = vmatprep.subr.mxu0 0.0
    %435 = vmatpush2.msra.mxu0 0.0
    %436 = vmatprep.subr.mxu0 0.0
    %437 = vmatpush2.msra.mxu0 0.0
    %438 = vmatprep.subr.mxu0 %v288
    %439 = vmatpush2.msra.mxu0 %v287
    %440 = vmatprep.subr.mxu0 %v282
    %441 = vmatpush2.msra.mxu0 %v281
    %442 = vmatprep.subr.mxu0 %v276
    %443 = vmatpush2.msra.mxu0 %v275
    %444 = vmatprep.subr.mxu0 %v270
    %445 = vmatpush2.msra.mxu0 %v269
    %446 = vmatprep.subr.mxu0 %v264
    %447 = vmatpush2.msra.mxu0 %v263
    %448 = vmatprep.subr.mxu0 %v258
    %449 = vmatpush2.msra.mxu0 %v257
    %450 = vmatprep.subr.mxu0 %v252
    %451 = vmatpush2.msra.mxu0 %v251
    %452 = vmatprep.subr.mxu0 %v246
    %453 = vmatpush2.msra.mxu0 %v245
    %454 = vmatprep.mubr.f32.mxu0 %v295
    %455 = vmatmul.mubr.f32.gmra.mxu0 %v85
    %v456 = vpop.f32.mrf.mxu0
    %v457 = vadd.f32 0.0, %v456
    %v458 = vpop.f32.mrf.mxu0
    %v459 = vadd.f32 0.0, %v458
    %460 = vmatprep.mubr.f32.mxu0 %v298
    %461 = vmatmul.mubr.f32.gmra.mxu0 %v87
    %v462 = vpop.f32.mrf.mxu0
    %v463 = vadd.f32 0.0, %v462
    %v464 = vpop.f32.mrf.mxu0
    %v465 = vadd.f32 0.0, %v464
    %466 = vmatprep.mubr.f32.mxu0 %v301
    %467 = vmatmul.mubr.f32.gmra.mxu0 %v89
    %v468 = vpop.f32.mrf.mxu0
    %v469 = vadd.f32 0.0, %v468
    %v470 = vpop.f32.mrf.mxu0
    %v471 = vadd.f32 0.0, %v470
    %472 = vmatprep.mubr.f32.mxu0 %v304
    %473 = vmatmul.mubr.f32.gmra.mxu0 %v91
    %v474 = vpop.f32.mrf.mxu0
    %v475 = vadd.f32 0.0, %v474
    %v476 = vpop.f32.mrf.mxu0
    %v477 = vadd.f32 0.0, %v476
    %478 = vmatprep.mubr.f32.mxu0 %v307
    %479 = vmatmul.mubr.f32.gmra.mxu0 %v93
    %v480 = vpop.f32.mrf.mxu0
    %v481 = vadd.f32 0.0, %v480
    %v482 = vpop.f32.mrf.mxu0
    %v483 = vadd.f32 0.0, %v482
    %484 = vmatprep.mubr.f32.mxu0 %v310
    %485 = vmatmul.mubr.f32.gmra.mxu0 %v95
    %v486 = vpop.f32.mrf.mxu0
    %v487 = vadd.f32 0.0, %v486
    %v488 = vpop.f32.mrf.mxu0
    %v489 = vadd.f32 0.0, %v488
    %490 = vmatprep.mubr.f32.mxu0 %v313
    %491 = vmatmul.mubr.f32.gmra.mxu0 %v97
    %v492 = vpop.f32.mrf.mxu0
    %v493 = vadd.f32 0.0, %v492
    %v494 = vpop.f32.mrf.mxu0
    %v495 = vadd.f32 0.0, %v494
    %496 = vmatprep.mubr.f32.mxu0 %v316
    %497 = vmatmul.mubr.f32.gmra.mxu0 %v99
    %v498 = vpop.f32.mrf.mxu0
    %v499 = vadd.f32 0.0, %v498
    %v500 = vpop.f32.mrf.mxu0
    %v501 = vadd.f32 0.0, %v500
    %502 = vmatprep.mubr.f32.mxu0 %v319
    %503 = vmatmul.mubr.f32.gmra.mxu0 %v101
    %v504 = vpop.f32.mrf.mxu0
    %v505 = vadd.f32 0.0, %v504
    %v506 = vpop.f32.mrf.mxu0
    %v507 = vadd.f32 0.0, %v506
    %508 = vmatprep.mubr.f32.mxu0 %v322
    %509 = vmatmul.mubr.f32.gmra.mxu0 %v103
    %v510 = vpop.f32.mrf.mxu0
    %v511 = vadd.f32 0.0, %v510
    %v512 = vpop.f32.mrf.mxu0
    %v513 = vadd.f32 0.0, %v512
    %514 = vmatprep.mubr.f32.mxu0 %v325
    %515 = vmatmul.mubr.f32.gmra.mxu0 %v105
    %v516 = vpop.f32.mrf.mxu0
    %v517 = vadd.f32 0.0, %v516
    %v518 = vpop.f32.mrf.mxu0
    %v519 = vadd.f32 0.0, %v518
    %520 = vmatprep.mubr.f32.mxu0 %v328
    %521 = vmatmul.mubr.f32.gmra.mxu0 %v107
    %v522 = vpop.f32.mrf.mxu0
    %v523 = vadd.f32 0.0, %v522
    %v524 = vpop.f32.mrf.mxu0
    %v525 = vadd.f32 0.0, %v524
    %526 = vmatprep.mubr.f32.mxu0 %v331
    %527 = vmatmul.mubr.f32.gmra.mxu0 %v109
    %v528 = vpop.f32.mrf.mxu0
    %v529 = vadd.f32 0.0, %v528
    %v530 = vpop.f32.mrf.mxu0
    %v531 = vadd.f32 0.0, %v530
    %532 = vmatprep.mubr.f32.mxu0 %v334
    %533 = vmatmul.mubr.f32.gmra.mxu0 %v111
    %v534 = vpop.f32.mrf.mxu0
    %v535 = vadd.f32 0.0, %v534
    %v536 = vpop.f32.mrf.mxu0
    %v537 = vadd.f32 0.0, %v536
    %538 = vmatprep.mubr.f32.mxu0 %v337
    %539 = vmatmul.mubr.f32.gmra.mxu0 %v113
    %v540 = vpop.f32.mrf.mxu0
    %v541 = vadd.f32 0.0, %v540
    %v542 = vpop.f32.mrf.mxu0
    %v543 = vadd.f32 0.0, %v542
    %544 = vmatprep.mubr.f32.mxu0 %v340
    %545 = vmatmul.mubr.f32.gmra.mxu0 %v115
    %v546 = vpop.f32.mrf.mxu0
    %v547 = vadd.f32 0.0, %v546
    %v548 = vpop.f32.mrf.mxu0
    %v549 = vadd.f32 0.0, %v548
    %550 = vmatprep.mubr.f32.mxu0 %v343
    %551 = vmatmul.mubr.f32.gmra.mxu0 %v117
    %v552 = vpop.f32.mrf.mxu0
    %v553 = vadd.f32 0.0, %v552
    %v554 = vpop.f32.mrf.mxu0
    %v555 = vadd.f32 0.0, %v554
    %556 = vmatprep.mubr.f32.mxu0 %v346
    %557 = vmatmul.mubr.f32.gmra.mxu0 %v119
    %v558 = vpop.f32.mrf.mxu0
    %v559 = vadd.f32 0.0, %v558
    %v560 = vpop.f32.mrf.mxu0
    %v561 = vadd.f32 0.0, %v560
    %562 = vmatprep.mubr.f32.mxu0 %v349
    %563 = vmatmul.mubr.f32.gmra.mxu0 %v121
    %v564 = vpop.f32.mrf.mxu0
    %v565 = vadd.f32 0.0, %v564
    %v566 = vpop.f32.mrf.mxu0
    %v567 = vadd.f32 0.0, %v566
    %568 = vmatprep.mubr.f32.mxu0 %v352
    %569 = vmatmul.mubr.f32.gmra.mxu0 %v123
    %v570 = vpop.f32.mrf.mxu0
    %v571 = vadd.f32 0.0, %v570
    %v572 = vpop.f32.mrf.mxu0
    %v573 = vadd.f32 0.0, %v572
    %574 = vmatprep.mubr.f32.mxu0 %v355
    %575 = vmatmul.mubr.f32.gmra.mxu0 %v125
    %v576 = vpop.f32.mrf.mxu0
    %v577 = vadd.f32 0.0, %v576
    %v578 = vpop.f32.mrf.mxu0
    %v579 = vadd.f32 0.0, %v578
    %580 = vmatprep.mubr.f32.mxu0 %v358
    %581 = vmatmul.mubr.f32.gmra.mxu0 %v127
    %v582 = vpop.f32.mrf.mxu0
    %v583 = vadd.f32 0.0, %v582
    %v584 = vpop.f32.mrf.mxu0
    %v585 = vadd.f32 0.0, %v584
    %586 = vmatprep.mubr.f32.mxu0 %v361
    %587 = vmatmul.mubr.f32.gmra.mxu0 %v129
    %v588 = vpop.f32.mrf.mxu0
    %v589 = vadd.f32 0.0, %v588
    %v590 = vpop.f32.mrf.mxu0
    %v591 = vadd.f32 0.0, %v590
    %592 = vmatprep.mubr.f32.mxu0 %v364
    %593 = vmatmul.mubr.f32.gmra.mxu0 %v131
    %v594 = vpop.f32.mrf.mxu0
    %v595 = vadd.f32 0.0, %v594
    %v596 = vpop.f32.mrf.mxu0
    %v597 = vadd.f32 0.0, %v596
    %598 = vmatprep.mubr.f32.mxu0 %v367
    %599 = vmatmul.mubr.f32.gmra.mxu0 %v133
    %v600 = vpop.f32.mrf.mxu0
    %v601 = vadd.f32 0.0, %v600
    %v602 = vpop.f32.mrf.mxu0
    %v603 = vadd.f32 0.0, %v602
    %604 = vmatprep.mubr.f32.mxu0 %v370
    %605 = vmatmul.mubr.f32.gmra.mxu0 %v135
    %v606 = vpop.f32.mrf.mxu0
    %v607 = vadd.f32 0.0, %v606
    %v608 = vpop.f32.mrf.mxu0
    %v609 = vadd.f32 0.0, %v608
    %610 = vmatprep.mubr.f32.mxu0 %v373
    %611 = vmatmul.mubr.f32.gmra.mxu0 %v137
    %v612 = vpop.f32.mrf.mxu0
    %v613 = vadd.f32 0.0, %v612
    %v614 = vpop.f32.mrf.mxu0
    %v615 = vadd.f32 0.0, %v614
    %616 = vmatprep.mubr.f32.mxu0 %v376
    %617 = vmatmul.mubr.f32.gmra.mxu0 %v139
    %v618 = vpop.f32.mrf.mxu0
    %v619 = vadd.f32 0.0, %v618
    %v620 = vpop.f32.mrf.mxu0
    %v621 = vadd.f32 0.0, %v620
    %622 = vmatprep.mubr.f32.mxu0 %v379
    %623 = vmatmul.mubr.f32.gmra.mxu0 %v141
    %v624 = vpop.f32.mrf.mxu0
    %v625 = vadd.f32 0.0, %v624
    %v626 = vpop.f32.mrf.mxu0
    %v627 = vadd.f32 0.0, %v626
    %628 = vmatprep.mubr.f32.mxu0 %v382
    %629 = vmatmul.mubr.f32.gmra.mxu0 %v143
    %v630 = vpop.f32.mrf.mxu0
    %v631 = vadd.f32 0.0, %v630
    %v632 = vpop.f32.mrf.mxu0
    %v633 = vadd.f32 0.0, %v632
    %634 = vmatprep.mubr.f32.mxu0 %v385
    %635 = vmatmul.mubr.f32.gmra.mxu0 %v145
    %v636 = vpop.f32.mrf.mxu0
    %v637 = vadd.f32 0.0, %v636
    %v638 = vpop.f32.mrf.mxu0
    %v639 = vadd.f32 0.0, %v638
    %640 = vmatprep.mubr.f32.mxu0 %v388
    %641 = vmatmul.mubr.f32.gmra.mxu0 %v147
    %v642 = vpop.f32.mrf.mxu0
    %v643 = vadd.f32 0.0, %v642
    %v644 = vpop.f32.mrf.mxu0
    %v645 = vadd.f32 0.0, %v644
    %646 = vdwg.mxu0
    %647 = vmatprep.subr.mxu0 %v242
    %648 = vmatpush1.msra.mxu0 %v241
    %649 = vmatprep.subr.mxu0 %v236
    %650 = vmatpush1.msra.mxu0 %v235
    %651 = vmatprep.subr.mxu0 %v230
    %652 = vmatpush1.msra.mxu0 %v229
    %653 = vmatprep.subr.mxu0 %v224
    %654 = vmatpush1.msra.mxu0 %v223
    %655 = vmatprep.subr.mxu0 %v218
    %656 = vmatpush1.msra.mxu0 %v217
    %657 = vmatprep.subr.mxu0 %v212
    %658 = vmatpush1.msra.mxu0 %v211
    %659 = vmatprep.subr.mxu0 %v206
    %660 = vmatpush1.msra.mxu0 %v205
    %661 = vmatprep.subr.mxu0 %v200
    %662 = vmatpush1.msra.mxu0 %v199
    %663 = vmatprep.subr.mxu0 %v194
    %664 = vmatpush1.msra.mxu0 %v193
    %665 = vmatprep.subr.mxu0 %v188
    %666 = vmatpush1.msra.mxu0 %v187
    %667 = vmatprep.subr.mxu0 %v182
    %668 = vmatpush1.msra.mxu0 %v181
    %669 = vmatprep.subr.mxu0 %v176
    %670 = vmatpush1.msra.mxu0 %v175
    %671 = vmatprep.subr.mxu0 %v170
    %672 = vmatpush1.msra.mxu0 %v169
    %673 = vmatprep.subr.mxu0 %v164
    %674 = vmatpush1.msra.mxu0 %v163
    %675 = vmatprep.subr.mxu0 %v158
    %676 = vmatpush1.msra.mxu0 %v157
    %677 = vmatprep.subr.mxu0 %v152
    %678 = vmatpush1.msra.mxu0 %v151
    %679 = vmatprep.subr.mxu0 0.0
    %680 = vmatpush2.msra.mxu0 0.0
    %681 = vmatprep.subr.mxu0 0.0
    %682 = vmatpush2.msra.mxu0 0.0
    %683 = vmatprep.subr.mxu0 0.0
    %684 = vmatpush2.msra.mxu0 0.0
    %685 = vmatprep.subr.mxu0 0.0
    %686 = vmatpush2.msra.mxu0 0.0
    %687 = vmatprep.subr.mxu0 0.0
    %688 = vmatpush2.msra.mxu0 0.0
    %689 = vmatprep.subr.mxu0 0.0
    %690 = vmatpush2.msra.mxu0 0.0
    %691 = vmatprep.subr.mxu0 0.0
    %692 = vmatpush2.msra.mxu0 0.0
    %693 = vmatprep.subr.mxu0 0.0
    %694 = vmatpush2.msra.mxu0 0.0
    %695 = vmatprep.subr.mxu0 %v290
    %696 = vmatpush2.msra.mxu0 %v289
    %697 = vmatprep.subr.mxu0 %v284
    %698 = vmatpush2.msra.mxu0 %v283
    %699 = vmatprep.subr.mxu0 %v278
    %700 = vmatpush2.msra.mxu0 %v277
    %701 = vmatprep.subr.mxu0 %v272
    %702 = vmatpush2.msra.mxu0 %v271
    %703 = vmatprep.subr.mxu0 %v266
    %704 = vmatpush2.msra.mxu0 %v265
    %705 = vmatprep.subr.mxu0 %v260
    %706 = vmatpush2.msra.mxu0 %v259
    %707 = vmatprep.subr.mxu0 %v254
    %708 = vmatpush2.msra.mxu0 %v253
    %709 = vmatprep.subr.mxu0 %v248
    %710 = vmatpush2.msra.mxu0 %v247
    %711 = vmatprep.mubr.f32.mxu0 %v295
    %712 = vmatmul.mubr.f32.gmra.mxu0 %v85
    %v713 = vpop.f32.mrf.mxu0
    %v714 = vadd.f32 0.0, %v713
    %v715 = vpop.f32.mrf.mxu0
    %v716 = vadd.f32 0.0, %v715
    %717 = vmatprep.mubr.f32.mxu0 %v298
    %718 = vmatmul.mubr.f32.gmra.mxu0 %v87
    %v719 = vpop.f32.mrf.mxu0
    %v720 = vadd.f32 0.0, %v719
    %v721 = vpop.f32.mrf.mxu0
    %v722 = vadd.f32 0.0, %v721
    %723 = vmatprep.mubr.f32.mxu0 %v301
    %724 = vmatmul.mubr.f32.gmra.mxu0 %v89
    %v725 = vpop.f32.mrf.mxu0
    %v726 = vadd.f32 0.0, %v725
    %v727 = vpop.f32.mrf.mxu0
    %v728 = vadd.f32 0.0, %v727
    %729 = vmatprep.mubr.f32.mxu0 %v304
    %730 = vmatmul.mubr.f32.gmra.mxu0 %v91
    %v731 = vpop.f32.mrf.mxu0
    %v732 = vadd.f32 0.0, %v731
    %v733 = vpop.f32.mrf.mxu0
    %v734 = vadd.f32 0.0, %v733
    %735 = vmatprep.mubr.f32.mxu0 %v307
    %736 = vmatmul.mubr.f32.gmra.mxu0 %v93
    %v737 = vpop.f32.mrf.mxu0
    %v738 = vadd.f32 0.0, %v737
    %v739 = vpop.f32.mrf.mxu0
    %v740 = vadd.f32 0.0, %v739
    %741 = vmatprep.mubr.f32.mxu0 %v310
    %742 = vmatmul.mubr.f32.gmra.mxu0 %v95
    %v743 = vpop.f32.mrf.mxu0
    %v744 = vadd.f32 0.0, %v743
    %v745 = vpop.f32.mrf.mxu0
    %v746 = vadd.f32 0.0, %v745
    %747 = vmatprep.mubr.f32.mxu0 %v313
    %748 = vmatmul.mubr.f32.gmra.mxu0 %v97
    %v749 = vpop.f32.mrf.mxu0
    %v750 = vadd.f32 0.0, %v749
    %v751 = vpop.f32.mrf.mxu0
    %v752 = vadd.f32 0.0, %v751
    %753 = vmatprep.mubr.f32.mxu0 %v316
    %754 = vmatmul.mubr.f32.gmra.mxu0 %v99
    %v755 = vpop.f32.mrf.mxu0
    %v756 = vadd.f32 0.0, %v755
    %v757 = vpop.f32.mrf.mxu0
    %v758 = vadd.f32 0.0, %v757
    %759 = vmatprep.mubr.f32.mxu0 %v319
    %760 = vmatmul.mubr.f32.gmra.mxu0 %v101
    %v761 = vpop.f32.mrf.mxu0
    %v762 = vadd.f32 0.0, %v761
    %v763 = vpop.f32.mrf.mxu0
    %v764 = vadd.f32 0.0, %v763
    %765 = vmatprep.mubr.f32.mxu0 %v322
    %766 = vmatmul.mubr.f32.gmra.mxu0 %v103
    %v767 = vpop.f32.mrf.mxu0
    %v768 = vadd.f32 0.0, %v767
    %v769 = vpop.f32.mrf.mxu0
    %v770 = vadd.f32 0.0, %v769
    %771 = vmatprep.mubr.f32.mxu0 %v325
    %772 = vmatmul.mubr.f32.gmra.mxu0 %v105
    %v773 = vpop.f32.mrf.mxu0
    %v774 = vadd.f32 0.0, %v773
    %v775 = vpop.f32.mrf.mxu0
    %v776 = vadd.f32 0.0, %v775
    %777 = vmatprep.mubr.f32.mxu0 %v328
    %778 = vmatmul.mubr.f32.gmra.mxu0 %v107
    %v779 = vpop.f32.mrf.mxu0
    %v780 = vadd.f32 0.0, %v779
    %v781 = vpop.f32.mrf.mxu0
    %v782 = vadd.f32 0.0, %v781
    %783 = vmatprep.mubr.f32.mxu0 %v331
    %784 = vmatmul.mubr.f32.gmra.mxu0 %v109
    %v785 = vpop.f32.mrf.mxu0
    %v786 = vadd.f32 0.0, %v785
    %v787 = vpop.f32.mrf.mxu0
    %v788 = vadd.f32 0.0, %v787
    %789 = vmatprep.mubr.f32.mxu0 %v334
    %790 = vmatmul.mubr.f32.gmra.mxu0 %v111
    %v791 = vpop.f32.mrf.mxu0
    %v792 = vadd.f32 0.0, %v791
    %v793 = vpop.f32.mrf.mxu0
    %v794 = vadd.f32 0.0, %v793
    %795 = vmatprep.mubr.f32.mxu0 %v337
    %796 = vmatmul.mubr.f32.gmra.mxu0 %v113
    %v797 = vpop.f32.mrf.mxu0
    %v798 = vadd.f32 0.0, %v797
    %v799 = vpop.f32.mrf.mxu0
    %v800 = vadd.f32 0.0, %v799
    %801 = vmatprep.mubr.f32.mxu0 %v340
    %802 = vmatmul.mubr.f32.gmra.mxu0 %v115
    %v803 = vpop.f32.mrf.mxu0
    %v804 = vadd.f32 0.0, %v803
    %v805 = vpop.f32.mrf.mxu0
    %v806 = vadd.f32 0.0, %v805
    %807 = vmatprep.mubr.f32.mxu0 %v343
    %808 = vmatmul.mubr.f32.gmra.mxu0 %v117
    %v809 = vpop.f32.mrf.mxu0
    %v810 = vadd.f32 0.0, %v809
    %v811 = vpop.f32.mrf.mxu0
    %v812 = vadd.f32 0.0, %v811
    %813 = vmatprep.mubr.f32.mxu0 %v346
    %814 = vmatmul.mubr.f32.gmra.mxu0 %v119
    %v815 = vpop.f32.mrf.mxu0
    %v816 = vadd.f32 0.0, %v815
    %v817 = vpop.f32.mrf.mxu0
    %v818 = vadd.f32 0.0, %v817
    %819 = vmatprep.mubr.f32.mxu0 %v349
    %820 = vmatmul.mubr.f32.gmra.mxu0 %v121
    %v821 = vpop.f32.mrf.mxu0
    %v822 = vadd.f32 0.0, %v821
    %v823 = vpop.f32.mrf.mxu0
    %v824 = vadd.f32 0.0, %v823
    %825 = vmatprep.mubr.f32.mxu0 %v352
    %826 = vmatmul.mubr.f32.gmra.mxu0 %v123
    %v827 = vpop.f32.mrf.mxu0
    %v828 = vadd.f32 0.0, %v827
    %v829 = vpop.f32.mrf.mxu0
    %v830 = vadd.f32 0.0, %v829
    %831 = vmatprep.mubr.f32.mxu0 %v355
    %832 = vmatmul.mubr.f32.gmra.mxu0 %v125
    %v833 = vpop.f32.mrf.mxu0
    %v834 = vadd.f32 0.0, %v833
    %v835 = vpop.f32.mrf.mxu0
    %v836 = vadd.f32 0.0, %v835
    %837 = vmatprep.mubr.f32.mxu0 %v358
    %838 = vmatmul.mubr.f32.gmra.mxu0 %v127
    %v839 = vpop.f32.mrf.mxu0
    %v840 = vadd.f32 0.0, %v839
    %v841 = vpop.f32.mrf.mxu0
    %v842 = vadd.f32 0.0, %v841
    %843 = vmatprep.mubr.f32.mxu0 %v361
    %844 = vmatmul.mubr.f32.gmra.mxu0 %v129
    %v845 = vpop.f32.mrf.mxu0
    %v846 = vadd.f32 0.0, %v845
    %v847 = vpop.f32.mrf.mxu0
    %v848 = vadd.f32 0.0, %v847
    %849 = vmatprep.mubr.f32.mxu0 %v364
    %850 = vmatmul.mubr.f32.gmra.mxu0 %v131
    %v851 = vpop.f32.mrf.mxu0
    %v852 = vadd.f32 0.0, %v851
    %v853 = vpop.f32.mrf.mxu0
    %v854 = vadd.f32 0.0, %v853
    %855 = vmatprep.mubr.f32.mxu0 %v367
    %856 = vmatmul.mubr.f32.gmra.mxu0 %v133
    %v857 = vpop.f32.mrf.mxu0
    %v858 = vadd.f32 0.0, %v857
    %v859 = vpop.f32.mrf.mxu0
    %v860 = vadd.f32 0.0, %v859
    %861 = vmatprep.mubr.f32.mxu0 %v370
    %862 = vmatmul.mubr.f32.gmra.mxu0 %v135
    %v863 = vpop.f32.mrf.mxu0
    %v864 = vadd.f32 0.0, %v863
    %v865 = vpop.f32.mrf.mxu0
    %v866 = vadd.f32 0.0, %v865
    %867 = vmatprep.mubr.f32.mxu0 %v373
    %868 = vmatmul.mubr.f32.gmra.mxu0 %v137
    %v869 = vpop.f32.mrf.mxu0
    %v870 = vadd.f32 0.0, %v869
    %v871 = vpop.f32.mrf.mxu0
    %v872 = vadd.f32 0.0, %v871
    %873 = vmatprep.mubr.f32.mxu0 %v376
    %874 = vmatmul.mubr.f32.gmra.mxu0 %v139
    %v875 = vpop.f32.mrf.mxu0
    %v876 = vadd.f32 0.0, %v875
    %v877 = vpop.f32.mrf.mxu0
    %v878 = vadd.f32 0.0, %v877
    %879 = vmatprep.mubr.f32.mxu0 %v379
    %880 = vmatmul.mubr.f32.gmra.mxu0 %v141
    %v881 = vpop.f32.mrf.mxu0
    %v882 = vadd.f32 0.0, %v881
    %v883 = vpop.f32.mrf.mxu0
    %v884 = vadd.f32 0.0, %v883
    %885 = vmatprep.mubr.f32.mxu0 %v382
    %886 = vmatmul.mubr.f32.gmra.mxu0 %v143
    %v887 = vpop.f32.mrf.mxu0
    %v888 = vadd.f32 0.0, %v887
    %v889 = vpop.f32.mrf.mxu0
    %v890 = vadd.f32 0.0, %v889
    %891 = vmatprep.mubr.f32.mxu0 %v385
    %892 = vmatmul.mubr.f32.gmra.mxu0 %v145
    %v893 = vpop.f32.mrf.mxu0
    %v894 = vadd.f32 0.0, %v893
    %v895 = vpop.f32.mrf.mxu0
    %v896 = vadd.f32 0.0, %v895
    %897 = vmatprep.mubr.f32.mxu0 %v388
    %898 = vmatmul.mubr.f32.gmra.mxu0 %v147
    %v899 = vpop.f32.mrf.mxu0
    %v900 = vadd.f32 0.0, %v899
    %v901 = vpop.f32.mrf.mxu0
    %v902 = vadd.f32 0.0, %v901
    %903 = vdwg.mxu0
    %904 = vmatprep.subr.mxu0 %v244
    %905 = vmatpush1.msra.mxu0 %v243
    %906 = vmatprep.subr.mxu0 %v238
    %907 = vmatpush1.msra.mxu0 %v237
    %908 = vmatprep.subr.mxu0 %v232
    %909 = vmatpush1.msra.mxu0 %v231
    %910 = vmatprep.subr.mxu0 %v226
    %911 = vmatpush1.msra.mxu0 %v225
    %912 = vmatprep.subr.mxu0 %v220
    %913 = vmatpush1.msra.mxu0 %v219
    %914 = vmatprep.subr.mxu0 %v214
    %915 = vmatpush1.msra.mxu0 %v213
    %916 = vmatprep.subr.mxu0 %v208
    %917 = vmatpush1.msra.mxu0 %v207
    %918 = vmatprep.subr.mxu0 %v202
    %919 = vmatpush1.msra.mxu0 %v201
    %920 = vmatprep.subr.mxu0 %v196
    %921 = vmatpush1.msra.mxu0 %v195
    %922 = vmatprep.subr.mxu0 %v190
    %923 = vmatpush1.msra.mxu0 %v189
    %924 = vmatprep.subr.mxu0 %v184
    %925 = vmatpush1.msra.mxu0 %v183
    %926 = vmatprep.subr.mxu0 %v178
    %927 = vmatpush1.msra.mxu0 %v177
    %928 = vmatprep.subr.mxu0 %v172
    %929 = vmatpush1.msra.mxu0 %v171
    %930 = vmatprep.subr.mxu0 %v166
    %931 = vmatpush1.msra.mxu0 %v165
    %932 = vmatprep.subr.mxu0 %v160
    %933 = vmatpush1.msra.mxu0 %v159
    %934 = vmatprep.subr.mxu0 %v154
    %935 = vmatpush1.msra.mxu0 %v153
    %936 = vmatprep.subr.mxu0 0.0
    %937 = vmatpush2.msra.mxu0 0.0
    %938 = vmatprep.subr.mxu0 0.0
    %939 = vmatpush2.msra.mxu0 0.0
    %940 = vmatprep.subr.mxu0 0.0
    %941 = vmatpush2.msra.mxu0 0.0
    %942 = vmatprep.subr.mxu0 0.0
    %943 = vmatpush2.msra.mxu0 0.0
    %944 = vmatprep.subr.mxu0 0.0
    %945 = vmatpush2.msra.mxu0 0.0
    %946 = vmatprep.subr.mxu0 0.0
    %947 = vmatpush2.msra.mxu0 0.0
    %948 = vmatprep.subr.mxu0 0.0
    %949 = vmatpush2.msra.mxu0 0.0
    %950 = vmatprep.subr.mxu0 0.0
    %951 = vmatpush2.msra.mxu0 0.0
    %952 = vmatprep.subr.mxu0 %v292
    %953 = vmatpush2.msra.mxu0 %v291
    %954 = vmatprep.subr.mxu0 %v286
    %955 = vmatpush2.msra.mxu0 %v285
    %956 = vmatprep.subr.mxu0 %v280
    %957 = vmatpush2.msra.mxu0 %v279
    %958 = vmatprep.subr.mxu0 %v274
    %959 = vmatpush2.msra.mxu0 %v273
    %960 = vmatprep.subr.mxu0 %v268
    %961 = vmatpush2.msra.mxu0 %v267
    %962 = vmatprep.subr.mxu0 %v262
    %963 = vmatpush2.msra.mxu0 %v261
    %964 = vmatprep.subr.mxu0 %v256
    %965 = vmatpush2.msra.mxu0 %v255
    %966 = vmatprep.subr.mxu0 %v250
    %967 = vmatpush2.msra.mxu0 %v249
    %968 = vmatprep.mubr.f32.mxu0 %v295
    %969 = vmatmul.mubr.f32.gmra.mxu0 %v85
    %v970 = vpop.f32.mrf.mxu0
    %v971 = vadd.f32 0.0, %v970
    %v972 = vpop.f32.mrf.mxu0
    %v973 = vadd.f32 0.0, %v972
    %974 = vmatprep.mubr.f32.mxu0 %v298
    %975 = vmatmul.mubr.f32.gmra.mxu0 %v87
    %v976 = vpop.f32.mrf.mxu0
    %v977 = vadd.f32 0.0, %v976
    %v978 = vpop.f32.mrf.mxu0
    %v979 = vadd.f32 0.0, %v978
    %980 = vmatprep.mubr.f32.mxu0 %v301
    %981 = vmatmul.mubr.f32.gmra.mxu0 %v89
    %v982 = vpop.f32.mrf.mxu0
    %v983 = vadd.f32 0.0, %v982
    %v984 = vpop.f32.mrf.mxu0
    %v985 = vadd.f32 0.0, %v984
    %986 = vmatprep.mubr.f32.mxu0 %v304
    %987 = vmatmul.mubr.f32.gmra.mxu0 %v91
    %v988 = vpop.f32.mrf.mxu0
    %v989 = vadd.f32 0.0, %v988
    %v990 = vpop.f32.mrf.mxu0
    %v991 = vadd.f32 0.0, %v990
    %992 = vmatprep.mubr.f32.mxu0 %v307
    %993 = vmatmul.mubr.f32.gmra.mxu0 %v93
    %v994 = vpop.f32.mrf.mxu0
    %v995 = vadd.f32 0.0, %v994
    %v996 = vpop.f32.mrf.mxu0
    %v997 = vadd.f32 0.0, %v996
    %998 = vmatprep.mubr.f32.mxu0 %v310
    %999 = vmatmul.mubr.f32.gmra.mxu0 %v95
    %v1000 = vpop.f32.mrf.mxu0
    %v1001 = vadd.f32 0.0, %v1000
    %v1002 = vpop.f32.mrf.mxu0
    %v1003 = vadd.f32 0.0, %v1002
    %1004 = vmatprep.mubr.f32.mxu0 %v313
    %1005 = vmatmul.mubr.f32.gmra.mxu0 %v97
    %v1006 = vpop.f32.mrf.mxu0
    %v1007 = vadd.f32 0.0, %v1006
    %v1008 = vpop.f32.mrf.mxu0
    %v1009 = vadd.f32 0.0, %v1008
    %1010 = vmatprep.mubr.f32.mxu0 %v316
    %1011 = vmatmul.mubr.f32.gmra.mxu0 %v99
    %v1012 = vpop.f32.mrf.mxu0
    %v1013 = vadd.f32 0.0, %v1012
    %v1014 = vpop.f32.mrf.mxu0
    %v1015 = vadd.f32 0.0, %v1014
    %1016 = vmatprep.mubr.f32.mxu0 %v319
    %1017 = vmatmul.mubr.f32.gmra.mxu0 %v101
    %v1018 = vpop.f32.mrf.mxu0
    %v1019 = vadd.f32 0.0, %v1018
    %v1020 = vpop.f32.mrf.mxu0
    %v1021 = vadd.f32 0.0, %v1020
    %1022 = vmatprep.mubr.f32.mxu0 %v322
    %1023 = vmatmul.mubr.f32.gmra.mxu0 %v103
    %v1024 = vpop.f32.mrf.mxu0
    %v1025 = vadd.f32 0.0, %v1024
    %v1026 = vpop.f32.mrf.mxu0
    %v1027 = vadd.f32 0.0, %v1026
    %1028 = vmatprep.mubr.f32.mxu0 %v325
    %1029 = vmatmul.mubr.f32.gmra.mxu0 %v105
    %v1030 = vpop.f32.mrf.mxu0
    %v1031 = vadd.f32 0.0, %v1030
    %v1032 = vpop.f32.mrf.mxu0
    %v1033 = vadd.f32 0.0, %v1032
    %1034 = vmatprep.mubr.f32.mxu0 %v328
    %1035 = vmatmul.mubr.f32.gmra.mxu0 %v107
    %v1036 = vpop.f32.mrf.mxu0
    %v1037 = vadd.f32 0.0, %v1036
    %v1038 = vpop.f32.mrf.mxu0
    %v1039 = vadd.f32 0.0, %v1038
    %1040 = vmatprep.mubr.f32.mxu0 %v331
    %1041 = vmatmul.mubr.f32.gmra.mxu0 %v109
    %v1042 = vpop.f32.mrf.mxu0
    %v1043 = vadd.f32 0.0, %v1042
    %v1044 = vpop.f32.mrf.mxu0
    %v1045 = vadd.f32 0.0, %v1044
    %1046 = vmatprep.mubr.f32.mxu0 %v334
    %1047 = vmatmul.mubr.f32.gmra.mxu0 %v111
    %v1048 = vpop.f32.mrf.mxu0
    %v1049 = vadd.f32 0.0, %v1048
    %v1050 = vpop.f32.mrf.mxu0
    %v1051 = vadd.f32 0.0, %v1050
    %1052 = vmatprep.mubr.f32.mxu0 %v337
    %1053 = vmatmul.mubr.f32.gmra.mxu0 %v113
    %v1054 = vpop.f32.mrf.mxu0
    %v1055 = vadd.f32 0.0, %v1054
    %v1056 = vpop.f32.mrf.mxu0
    %v1057 = vadd.f32 0.0, %v1056
    %1058 = vmatprep.mubr.f32.mxu0 %v340
    %1059 = vmatmul.mubr.f32.gmra.mxu0 %v115
    %v1060 = vpop.f32.mrf.mxu0
    %v1061 = vadd.f32 0.0, %v1060
    %v1062 = vpop.f32.mrf.mxu0
    %v1063 = vadd.f32 0.0, %v1062
    %1064 = vmatprep.mubr.f32.mxu0 %v343
    %1065 = vmatmul.mubr.f32.gmra.mxu0 %v117
    %v1066 = vpop.f32.mrf.mxu0
    %v1067 = vadd.f32 0.0, %v1066
    %v1068 = vpop.f32.mrf.mxu0
    %v1069 = vadd.f32 0.0, %v1068
    %1070 = vmatprep.mubr.f32.mxu0 %v346
    %1071 = vmatmul.mubr.f32.gmra.mxu0 %v119
    %v1072 = vpop.f32.mrf.mxu0
    %v1073 = vadd.f32 0.0, %v1072
    %v1074 = vpop.f32.mrf.mxu0
    %v1075 = vadd.f32 0.0, %v1074
    %1076 = vmatprep.mubr.f32.mxu0 %v349
    %1077 = vmatmul.mubr.f32.gmra.mxu0 %v121
    %v1078 = vpop.f32.mrf.mxu0
    %v1079 = vadd.f32 0.0, %v1078
    %v1080 = vpop.f32.mrf.mxu0
    %v1081 = vadd.f32 0.0, %v1080
    %1082 = vmatprep.mubr.f32.mxu0 %v352
    %1083 = vmatmul.mubr.f32.gmra.mxu0 %v123
    %v1084 = vpop.f32.mrf.mxu0
    %v1085 = vadd.f32 0.0, %v1084
    %v1086 = vpop.f32.mrf.mxu0
    %v1087 = vadd.f32 0.0, %v1086
    %1088 = vmatprep.mubr.f32.mxu0 %v355
    %1089 = vmatmul.mubr.f32.gmra.mxu0 %v125
    %v1090 = vpop.f32.mrf.mxu0
    %v1091 = vadd.f32 0.0, %v1090
    %v1092 = vpop.f32.mrf.mxu0
    %v1093 = vadd.f32 0.0, %v1092
    %1094 = vmatprep.mubr.f32.mxu0 %v358
    %1095 = vmatmul.mubr.f32.gmra.mxu0 %v127
    %v1096 = vpop.f32.mrf.mxu0
    %v1097 = vadd.f32 0.0, %v1096
    %v1098 = vpop.f32.mrf.mxu0
    %v1099 = vadd.f32 0.0, %v1098
    %1100 = vmatprep.mubr.f32.mxu0 %v361
    %1101 = vmatmul.mubr.f32.gmra.mxu0 %v129
    %v1102 = vpop.f32.mrf.mxu0
    %v1103 = vadd.f32 0.0, %v1102
    %v1104 = vpop.f32.mrf.mxu0
    %v1105 = vadd.f32 0.0, %v1104
    %1106 = vmatprep.mubr.f32.mxu0 %v364
    %1107 = vmatmul.mubr.f32.gmra.mxu0 %v131
    %v1108 = vpop.f32.mrf.mxu0
    %v1109 = vadd.f32 0.0, %v1108
    %v1110 = vpop.f32.mrf.mxu0
    %v1111 = vadd.f32 0.0, %v1110
    %1112 = vmatprep.mubr.f32.mxu0 %v367
    %1113 = vmatmul.mubr.f32.gmra.mxu0 %v133
    %v1114 = vpop.f32.mrf.mxu0
    %v1115 = vadd.f32 0.0, %v1114
    %v1116 = vpop.f32.mrf.mxu0
    %v1117 = vadd.f32 0.0, %v1116
    %1118 = vmatprep.mubr.f32.mxu0 %v370
    %1119 = vmatmul.mubr.f32.gmra.mxu0 %v135
    %v1120 = vpop.f32.mrf.mxu0
    %v1121 = vadd.f32 0.0, %v1120
    %v1122 = vpop.f32.mrf.mxu0
    %v1123 = vadd.f32 0.0, %v1122
    %1124 = vmatprep.mubr.f32.mxu0 %v373
    %1125 = vmatmul.mubr.f32.gmra.mxu0 %v137
    %v1126 = vpop.f32.mrf.mxu0
    %v1127 = vadd.f32 0.0, %v1126
    %v1128 = vpop.f32.mrf.mxu0
    %v1129 = vadd.f32 0.0, %v1128
    %1130 = vmatprep.mubr.f32.mxu0 %v376
    %1131 = vmatmul.mubr.f32.gmra.mxu0 %v139
    %v1132 = vpop.f32.mrf.mxu0
    %v1133 = vadd.f32 0.0, %v1132
    %v1134 = vpop.f32.mrf.mxu0
    %v1135 = vadd.f32 0.0, %v1134
    %1136 = vmatprep.mubr.f32.mxu0 %v379
    %1137 = vmatmul.mubr.f32.gmra.mxu0 %v141
    %v1138 = vpop.f32.mrf.mxu0
    %v1139 = vadd.f32 0.0, %v1138
    %v1140 = vpop.f32.mrf.mxu0
    %v1141 = vadd.f32 0.0, %v1140
    %1142 = vmatprep.mubr.f32.mxu0 %v382
    %1143 = vmatmul.mubr.f32.gmra.mxu0 %v143
    %v1144 = vpop.f32.mrf.mxu0
    %v1145 = vadd.f32 0.0, %v1144
    %v1146 = vpop.f32.mrf.mxu0
    %v1147 = vadd.f32 0.0, %v1146
    %1148 = vmatprep.mubr.f32.mxu0 %v385
    %1149 = vmatmul.mubr.f32.gmra.mxu0 %v145
    %v1150 = vpop.f32.mrf.mxu0
    %v1151 = vadd.f32 0.0, %v1150
    %v1152 = vpop.f32.mrf.mxu0
    %v1153 = vadd.f32 0.0, %v1152
    %1154 = vmatprep.mubr.f32.mxu0 %v388
    %1155 = vmatmul.mubr.f32.gmra.mxu0 %v147
    %v1156 = vpop.f32.mrf.mxu0
    %v1157 = vadd.f32 0.0, %v1156
    %v1158 = vpop.f32.mrf.mxu0
    %v1159 = vadd.f32 0.0, %v1158
    %1160 = vdwg.mxu0
    %v1161 = vld [vmem:[#allocation7] sm:$0x3f]
    %v1163 = vlaneseq
    %v1164 = vshrl.u32 %v1163, 7
    %v1165 = vsub.s32 0, %v1164
    %v1166 = vrot.slane %v1161, %v1165
    %v1167 = vlaneseq
    %v1168 = vshrl.u32 %v1167, 7
    %v1169 = vsub.s32 1, %v1168
    %v1170 = vrot.slane %v1161, %v1169
    %v1171 = vlaneseq
    %v1172 = vshrl.u32 %v1171, 7
    %v1173 = vsub.s32 2, %v1172
    %v1174 = vrot.slane %v1161, %v1173
    %v1175 = vlaneseq
    %v1176 = vshrl.u32 %v1175, 7
    %v1177 = vsub.s32 3, %v1176
    %v1178 = vrot.slane %v1161, %v1177
    %v1179 = vlaneseq
    %v1180 = vshrl.u32 %v1179, 7
    %v1181 = vsub.s32 4, %v1180
    %v1182 = vrot.slane %v1161, %v1181
    %v1183 = vlaneseq
    %v1184 = vshrl.u32 %v1183, 7
    %v1185 = vsub.s32 5, %v1184
    %v1186 = vrot.slane %v1161, %v1185
    %v1193 = vmul.f32 %v457, %v1166
    %v1194 = vmul.f32 %v459, %v1170
    %v1195 = vmul.f32 %v714, %v1174
    %v1196 = vmul.f32 %v716, %v1178
    %v1197 = vmul.f32 %v971, %v1182
    %v1198 = vmul.f32 %v973, %v1186
    %v1199 = vmul.f32 %v463, %v1166
    %v1200 = vmul.f32 %v465, %v1170
    %v1201 = vmul.f32 %v720, %v1174
    %v1202 = vmul.f32 %v722, %v1178
    %v1203 = vmul.f32 %v977, %v1182
    %v1204 = vmul.f32 %v979, %v1186
    %v1205 = vmul.f32 %v469, %v1166
    %v1206 = vmul.f32 %v471, %v1170
    %v1207 = vmul.f32 %v726, %v1174
    %v1208 = vmul.f32 %v728, %v1178
    %v1209 = vmul.f32 %v983, %v1182
    %v1210 = vmul.f32 %v985, %v1186
    %v1211 = vmul.f32 %v475, %v1166
    %v1212 = vmul.f32 %v477, %v1170
    %v1213 = vmul.f32 %v732, %v1174
    %v1214 = vmul.f32 %v734, %v1178
    %v1215 = vmul.f32 %v989, %v1182
    %v1216 = vmul.f32 %v991, %v1186
    %v1217 = vmul.f32 %v481, %v1166
    %v1218 = vmul.f32 %v483, %v1170
    %v1219 = vmul.f32 %v738, %v1174
    %v1220 = vmul.f32 %v740, %v1178
    %v1221 = vmul.f32 %v995, %v1182
    %v1222 = vmul.f32 %v997, %v1186
    %v1223 = vmul.f32 %v487, %v1166
    %v1224 = vmul.f32 %v489, %v1170
    %v1225 = vmul.f32 %v744, %v1174
    %v1226 = vmul.f32 %v746, %v1178
    %v1227 = vmul.f32 %v1001, %v1182
    %v1228 = vmul.f32 %v1003, %v1186
    %v1229 = vmul.f32 %v493, %v1166
    %v1230 = vmul.f32 %v495, %v1170
    %v1231 = vmul.f32 %v750, %v1174
    %v1232 = vmul.f32 %v752, %v1178
    %v1233 = vmul.f32 %v1007, %v1182
    %v1234 = vmul.f32 %v1009, %v1186
    %v1235 = vmul.f32 %v499, %v1166
    %v1236 = vmul.f32 %v501, %v1170
    %v1237 = vmul.f32 %v756, %v1174
    %v1238 = vmul.f32 %v758, %v1178
    %v1239 = vmul.f32 %v1013, %v1182
    %v1240 = vmul.f32 %v1015, %v1186
    %v1241 = vmul.f32 %v505, %v1166
    %v1242 = vmul.f32 %v507, %v1170
    %v1243 = vmul.f32 %v762, %v1174
    %v1244 = vmul.f32 %v764, %v1178
    %v1245 = vmul.f32 %v1019, %v1182
    %v1246 = vmul.f32 %v1021, %v1186
    %v1247 = vmul.f32 %v511, %v1166
    %v1248 = vmul.f32 %v513, %v1170
    %v1249 = vmul.f32 %v768, %v1174
    %v1250 = vmul.f32 %v770, %v1178
    %v1251 = vmul.f32 %v1025, %v1182
    %v1252 = vmul.f32 %v1027, %v1186
    %v1253 = vmul.f32 %v517, %v1166
    %v1254 = vmul.f32 %v519, %v1170
    %v1255 = vmul.f32 %v774, %v1174
    %v1256 = vmul.f32 %v776, %v1178
    %v1257 = vmul.f32 %v1031, %v1182
    %v1258 = vmul.f32 %v1033, %v1186
    %v1259 = vmul.f32 %v523, %v1166
    %v1260 = vmul.f32 %v525, %v1170
    %v1261 = vmul.f32 %v780, %v1174
    %v1262 = vmul.f32 %v782, %v1178
    %v1263 = vmul.f32 %v1037, %v1182
    %v1264 = vmul.f32 %v1039, %v1186
    %v1265 = vmul.f32 %v529, %v1166
    %v1266 = vmul.f32 %v531, %v1170
    %v1267 = vmul.f32 %v786, %v1174
    %v1268 = vmul.f32 %v788, %v1178
    %v1269 = vmul.f32 %v1043, %v1182
    %v1270 = vmul.f32 %v1045, %v1186
    %v1271 = vmul.f32 %v535, %v1166
    %v1272 = vmul.f32 %v537, %v1170
    %v1273 = vmul.f32 %v792, %v1174
    %v1274 = vmul.f32 %v794, %v1178
    %v1275 = vmul.f32 %v1049, %v1182
    %v1276 = vmul.f32 %v1051, %v1186
    %v1277 = vmul.f32 %v541, %v1166
    %v1278 = vmul.f32 %v543, %v1170
    %v1279 = vmul.f32 %v798, %v1174
    %v1280 = vmul.f32 %v800, %v1178
    %v1281 = vmul.f32 %v1055, %v1182
    %v1282 = vmul.f32 %v1057, %v1186
    %v1283 = vmul.f32 %v547, %v1166
    %v1284 = vmul.f32 %v549, %v1170
    %v1285 = vmul.f32 %v804, %v1174
    %v1286 = vmul.f32 %v806, %v1178
    %v1287 = vmul.f32 %v1061, %v1182
    %v1288 = vmul.f32 %v1063, %v1186
    %v1289 = vmul.f32 %v553, %v1166
    %v1290 = vmul.f32 %v555, %v1170
    %v1291 = vmul.f32 %v810, %v1174
    %v1292 = vmul.f32 %v812, %v1178
    %v1293 = vmul.f32 %v1067, %v1182
    %v1294 = vmul.f32 %v1069, %v1186
    %v1295 = vmul.f32 %v559, %v1166
    %v1296 = vmul.f32 %v561, %v1170
    %v1297 = vmul.f32 %v816, %v1174
    %v1298 = vmul.f32 %v818, %v1178
    %v1299 = vmul.f32 %v1073, %v1182
    %v1300 = vmul.f32 %v1075, %v1186
    %v1301 = vmul.f32 %v565, %v1166
    %v1302 = vmul.f32 %v567, %v1170
    %v1303 = vmul.f32 %v822, %v1174
    %v1304 = vmul.f32 %v824, %v1178
    %v1305 = vmul.f32 %v1079, %v1182
    %v1306 = vmul.f32 %v1081, %v1186
    %v1307 = vmul.f32 %v571, %v1166
    %v1308 = vmul.f32 %v573, %v1170
    %v1309 = vmul.f32 %v828, %v1174
    %v1310 = vmul.f32 %v830, %v1178
    %v1311 = vmul.f32 %v1085, %v1182
    %v1312 = vmul.f32 %v1087, %v1186
    %v1313 = vmul.f32 %v577, %v1166
    %v1314 = vmul.f32 %v579, %v1170
    %v1315 = vmul.f32 %v834, %v1174
    %v1316 = vmul.f32 %v836, %v1178
    %v1317 = vmul.f32 %v1091, %v1182
    %v1318 = vmul.f32 %v1093, %v1186
    %v1319 = vmul.f32 %v583, %v1166
    %v1320 = vmul.f32 %v585, %v1170
    %v1321 = vmul.f32 %v840, %v1174
    %v1322 = vmul.f32 %v842, %v1178
    %v1323 = vmul.f32 %v1097, %v1182
    %v1324 = vmul.f32 %v1099, %v1186
    %v1325 = vmul.f32 %v589, %v1166
    %v1326 = vmul.f32 %v591, %v1170
    %v1327 = vmul.f32 %v846, %v1174
    %v1328 = vmul.f32 %v848, %v1178
    %v1329 = vmul.f32 %v1103, %v1182
    %v1330 = vmul.f32 %v1105, %v1186
    %v1331 = vmul.f32 %v595, %v1166
    %v1332 = vmul.f32 %v597, %v1170
    %v1333 = vmul.f32 %v852, %v1174
    %v1334 = vmul.f32 %v854, %v1178
    %v1335 = vmul.f32 %v1109, %v1182
    %v1336 = vmul.f32 %v1111, %v1186
    %v1337 = vmul.f32 %v601, %v1166
    %v1338 = vmul.f32 %v603, %v1170
    %v1339 = vmul.f32 %v858, %v1174
    %v1340 = vmul.f32 %v860, %v1178
    %v1341 = vmul.f32 %v1115, %v1182
    %v1342 = vmul.f32 %v1117, %v1186
    %v1343 = vmul.f32 %v607, %v1166
    %v1344 = vmul.f32 %v609, %v1170
    %v1345 = vmul.f32 %v864, %v1174
    %v1346 = vmul.f32 %v866, %v1178
    %v1347 = vmul.f32 %v1121, %v1182
    %v1348 = vmul.f32 %v1123, %v1186
    %v1349 = vmul.f32 %v613, %v1166
    %v1350 = vmul.f32 %v615, %v1170
    %v1351 = vmul.f32 %v870, %v1174
    %v1352 = vmul.f32 %v872, %v1178
    %v1353 = vmul.f32 %v1127, %v1182
    %v1354 = vmul.f32 %v1129, %v1186
    %v1355 = vmul.f32 %v619, %v1166
    %v1356 = vmul.f32 %v621, %v1170
    %v1357 = vmul.f32 %v876, %v1174
    %v1358 = vmul.f32 %v878, %v1178
    %v1359 = vmul.f32 %v1133, %v1182
    %v1360 = vmul.f32 %v1135, %v1186
    %v1361 = vmul.f32 %v625, %v1166
    %v1362 = vmul.f32 %v627, %v1170
    %v1363 = vmul.f32 %v882, %v1174
    %v1364 = vmul.f32 %v884, %v1178
    %v1365 = vmul.f32 %v1139, %v1182
    %v1366 = vmul.f32 %v1141, %v1186
    %v1367 = vmul.f32 %v631, %v1166
    %v1368 = vmul.f32 %v633, %v1170
    %v1369 = vmul.f32 %v888, %v1174
    %v1370 = vmul.f32 %v890, %v1178
    %v1371 = vmul.f32 %v1145, %v1182
    %v1372 = vmul.f32 %v1147, %v1186
    %v1373 = vmul.f32 %v637, %v1166
    %v1374 = vmul.f32 %v639, %v1170
    %v1375 = vmul.f32 %v894, %v1174
    %v1376 = vmul.f32 %v896, %v1178
    %v1377 = vmul.f32 %v1151, %v1182
    %v1378 = vmul.f32 %v1153, %v1186
    %v1379 = vmul.f32 %v643, %v1166
    %v1380 = vmul.f32 %v645, %v1170
    %v1381 = vmul.f32 %v900, %v1174
    %v1382 = vmul.f32 %v902, %v1178
    %v1383 = vmul.f32 %v1157, %v1182
    %v1384 = vmul.f32 %v1159, %v1186
    %v1385 = vld [vmem:[#allocation8] sm:$0x3f]
    %v1387 = vlaneseq
    %v1388 = vshrl.u32 %v1387, 7
    %v1389 = vsub.s32 0, %v1388
    %v1390 = vrot.slane %v1385, %v1389
    %v1391 = vlaneseq
    %v1392 = vshrl.u32 %v1391, 7
    %v1393 = vsub.s32 1, %v1392
    %v1394 = vrot.slane %v1385, %v1393
    %v1395 = vlaneseq
    %v1396 = vshrl.u32 %v1395, 7
    %v1397 = vsub.s32 2, %v1396
    %v1398 = vrot.slane %v1385, %v1397
    %v1399 = vlaneseq
    %v1400 = vshrl.u32 %v1399, 7
    %v1401 = vsub.s32 3, %v1400
    %v1402 = vrot.slane %v1385, %v1401
    %v1403 = vlaneseq
    %v1404 = vshrl.u32 %v1403, 7
    %v1405 = vsub.s32 4, %v1404
    %v1406 = vrot.slane %v1385, %v1405
    %v1407 = vlaneseq
    %v1408 = vshrl.u32 %v1407, 7
    %v1409 = vsub.s32 5, %v1408
    %v1410 = vrot.slane %v1385, %v1409
    %v1417 = vadd.f32 %v1193, %v1390
    %v1418 = vadd.f32 %v1194, %v1394
    %v1419 = vadd.f32 %v1195, %v1398
    %v1420 = vadd.f32 %v1196, %v1402
    %v1421 = vadd.f32 %v1197, %v1406
    %v1422 = vadd.f32 %v1198, %v1410
    %v1423 = vadd.f32 %v1199, %v1390
    %v1424 = vadd.f32 %v1200, %v1394
    %v1425 = vadd.f32 %v1201, %v1398
    %v1426 = vadd.f32 %v1202, %v1402
    %v1427 = vadd.f32 %v1203, %v1406
    %v1428 = vadd.f32 %v1204, %v1410
    %v1429 = vadd.f32 %v1205, %v1390
    %v1430 = vadd.f32 %v1206, %v1394
    %v1431 = vadd.f32 %v1207, %v1398
    %v1432 = vadd.f32 %v1208, %v1402
    %v1433 = vadd.f32 %v1209, %v1406
    %v1434 = vadd.f32 %v1210, %v1410
    %v1435 = vadd.f32 %v1211, %v1390
    %v1436 = vadd.f32 %v1212, %v1394
    %v1437 = vadd.f32 %v1213, %v1398
    %v1438 = vadd.f32 %v1214, %v1402
    %v1439 = vadd.f32 %v1215, %v1406
    %v1440 = vadd.f32 %v1216, %v1410
    %v1441 = vadd.f32 %v1217, %v1390
    %v1442 = vadd.f32 %v1218, %v1394
    %v1443 = vadd.f32 %v1219, %v1398
    %v1444 = vadd.f32 %v1220, %v1402
    %v1445 = vadd.f32 %v1221, %v1406
    %v1446 = vadd.f32 %v1222, %v1410
    %v1447 = vadd.f32 %v1223, %v1390
    %v1448 = vadd.f32 %v1224, %v1394
    %v1449 = vadd.f32 %v1225, %v1398
    %v1450 = vadd.f32 %v1226, %v1402
    %v1451 = vadd.f32 %v1227, %v1406
    %v1452 = vadd.f32 %v1228, %v1410
    %v1453 = vadd.f32 %v1229, %v1390
    %v1454 = vadd.f32 %v1230, %v1394
    %v1455 = vadd.f32 %v1231, %v1398
    %v1456 = vadd.f32 %v1232, %v1402
    %v1457 = vadd.f32 %v1233, %v1406
    %v1458 = vadd.f32 %v1234, %v1410
    %v1459 = vadd.f32 %v1235, %v1390
    %v1460 = vadd.f32 %v1236, %v1394
    %v1461 = vadd.f32 %v1237, %v1398
    %v1462 = vadd.f32 %v1238, %v1402
    %v1463 = vadd.f32 %v1239, %v1406
    %v1464 = vadd.f32 %v1240, %v1410
    %v1465 = vadd.f32 %v1241, %v1390
    %v1466 = vadd.f32 %v1242, %v1394
    %v1467 = vadd.f32 %v1243, %v1398
    %v1468 = vadd.f32 %v1244, %v1402
    %v1469 = vadd.f32 %v1245, %v1406
    %v1470 = vadd.f32 %v1246, %v1410
    %v1471 = vadd.f32 %v1247, %v1390
    %v1472 = vadd.f32 %v1248, %v1394
    %v1473 = vadd.f32 %v1249, %v1398
    %v1474 = vadd.f32 %v1250, %v1402
    %v1475 = vadd.f32 %v1251, %v1406
    %v1476 = vadd.f32 %v1252, %v1410
    %v1477 = vadd.f32 %v1253, %v1390
    %v1478 = vadd.f32 %v1254, %v1394
    %v1479 = vadd.f32 %v1255, %v1398
    %v1480 = vadd.f32 %v1256, %v1402
    %v1481 = vadd.f32 %v1257, %v1406
    %v1482 = vadd.f32 %v1258, %v1410
    %v1483 = vadd.f32 %v1259, %v1390
    %v1484 = vadd.f32 %v1260, %v1394
    %v1485 = vadd.f32 %v1261, %v1398
    %v1486 = vadd.f32 %v1262, %v1402
    %v1487 = vadd.f32 %v1263, %v1406
    %v1488 = vadd.f32 %v1264, %v1410
    %v1489 = vadd.f32 %v1265, %v1390
    %v1490 = vadd.f32 %v1266, %v1394
    %v1491 = vadd.f32 %v1267, %v1398
    %v1492 = vadd.f32 %v1268, %v1402
    %v1493 = vadd.f32 %v1269, %v1406
    %v1494 = vadd.f32 %v1270, %v1410
    %v1495 = vadd.f32 %v1271, %v1390
    %v1496 = vadd.f32 %v1272, %v1394
    %v1497 = vadd.f32 %v1273, %v1398
    %v1498 = vadd.f32 %v1274, %v1402
    %v1499 = vadd.f32 %v1275, %v1406
    %v1500 = vadd.f32 %v1276, %v1410
    %v1501 = vadd.f32 %v1277, %v1390
    %v1502 = vadd.f32 %v1278, %v1394
    %v1503 = vadd.f32 %v1279, %v1398
    %v1504 = vadd.f32 %v1280, %v1402
    %v1505 = vadd.f32 %v1281, %v1406
    %v1506 = vadd.f32 %v1282, %v1410
    %v1507 = vadd.f32 %v1283, %v1390
    %v1508 = vadd.f32 %v1284, %v1394
    %v1509 = vadd.f32 %v1285, %v1398
    %v1510 = vadd.f32 %v1286, %v1402
    %v1511 = vadd.f32 %v1287, %v1406
    %v1512 = vadd.f32 %v1288, %v1410
    %v1513 = vadd.f32 %v1289, %v1390
    %v1514 = vadd.f32 %v1290, %v1394
    %v1515 = vadd.f32 %v1291, %v1398
    %v1516 = vadd.f32 %v1292, %v1402
    %v1517 = vadd.f32 %v1293, %v1406
    %v1518 = vadd.f32 %v1294, %v1410
    %v1519 = vadd.f32 %v1295, %v1390
    %v1520 = vadd.f32 %v1296, %v1394
    %v1521 = vadd.f32 %v1297, %v1398
    %v1522 = vadd.f32 %v1298, %v1402
    %v1523 = vadd.f32 %v1299, %v1406
    %v1524 = vadd.f32 %v1300, %v1410
    %v1525 = vadd.f32 %v1301, %v1390
    %v1526 = vadd.f32 %v1302, %v1394
    %v1527 = vadd.f32 %v1303, %v1398
    %v1528 = vadd.f32 %v1304, %v1402
    %v1529 = vadd.f32 %v1305, %v1406
    %v1530 = vadd.f32 %v1306, %v1410
    %v1531 = vadd.f32 %v1307, %v1390
    %v1532 = vadd.f32 %v1308, %v1394
    %v1533 = vadd.f32 %v1309, %v1398
    %v1534 = vadd.f32 %v1310, %v1402
    %v1535 = vadd.f32 %v1311, %v1406
    %v1536 = vadd.f32 %v1312, %v1410
    %v1537 = vadd.f32 %v1313, %v1390
    %v1538 = vadd.f32 %v1314, %v1394
    %v1539 = vadd.f32 %v1315, %v1398
    %v1540 = vadd.f32 %v1316, %v1402
    %v1541 = vadd.f32 %v1317, %v1406
    %v1542 = vadd.f32 %v1318, %v1410
    %v1543 = vadd.f32 %v1319, %v1390
    %v1544 = vadd.f32 %v1320, %v1394
    %v1545 = vadd.f32 %v1321, %v1398
    %v1546 = vadd.f32 %v1322, %v1402
    %v1547 = vadd.f32 %v1323, %v1406
    %v1548 = vadd.f32 %v1324, %v1410
    %v1549 = vadd.f32 %v1325, %v1390
    %v1550 = vadd.f32 %v1326, %v1394
    %v1551 = vadd.f32 %v1327, %v1398
    %v1552 = vadd.f32 %v1328, %v1402
    %v1553 = vadd.f32 %v1329, %v1406
    %v1554 = vadd.f32 %v1330, %v1410
    %v1555 = vadd.f32 %v1331, %v1390
    %v1556 = vadd.f32 %v1332, %v1394
    %v1557 = vadd.f32 %v1333, %v1398
    %v1558 = vadd.f32 %v1334, %v1402
    %v1559 = vadd.f32 %v1335, %v1406
    %v1560 = vadd.f32 %v1336, %v1410
    %v1561 = vadd.f32 %v1337, %v1390
    %v1562 = vadd.f32 %v1338, %v1394
    %v1563 = vadd.f32 %v1339, %v1398
    %v1564 = vadd.f32 %v1340, %v1402
    %v1565 = vadd.f32 %v1341, %v1406
    %v1566 = vadd.f32 %v1342, %v1410
    %v1567 = vadd.f32 %v1343, %v1390
    %v1568 = vadd.f32 %v1344, %v1394
    %v1569 = vadd.f32 %v1345, %v1398
    %v1570 = vadd.f32 %v1346, %v1402
    %v1571 = vadd.f32 %v1347, %v1406
    %v1572 = vadd.f32 %v1348, %v1410
    %v1573 = vadd.f32 %v1349, %v1390
    %v1574 = vadd.f32 %v1350, %v1394
    %v1575 = vadd.f32 %v1351, %v1398
    %v1576 = vadd.f32 %v1352, %v1402
    %v1577 = vadd.f32 %v1353, %v1406
    %v1578 = vadd.f32 %v1354, %v1410
    %v1579 = vadd.f32 %v1355, %v1390
    %v1580 = vadd.f32 %v1356, %v1394
    %v1581 = vadd.f32 %v1357, %v1398
    %v1582 = vadd.f32 %v1358, %v1402
    %v1583 = vadd.f32 %v1359, %v1406
    %v1584 = vadd.f32 %v1360, %v1410
    %v1585 = vadd.f32 %v1361, %v1390
    %v1586 = vadd.f32 %v1362, %v1394
    %v1587 = vadd.f32 %v1363, %v1398
    %v1588 = vadd.f32 %v1364, %v1402
    %v1589 = vadd.f32 %v1365, %v1406
    %v1590 = vadd.f32 %v1366, %v1410
    %v1591 = vadd.f32 %v1367, %v1390
    %v1592 = vadd.f32 %v1368, %v1394
    %v1593 = vadd.f32 %v1369, %v1398
    %v1594 = vadd.f32 %v1370, %v1402
    %v1595 = vadd.f32 %v1371, %v1406
    %v1596 = vadd.f32 %v1372, %v1410
    %v1597 = vadd.f32 %v1373, %v1390
    %v1598 = vadd.f32 %v1374, %v1394
    %v1599 = vadd.f32 %v1375, %v1398
    %v1600 = vadd.f32 %v1376, %v1402
    %v1601 = vadd.f32 %v1377, %v1406
    %v1602 = vadd.f32 %v1378, %v1410
    %v1603 = vadd.f32 %v1379, %v1390
    %v1604 = vadd.f32 %v1380, %v1394
    %v1605 = vadd.f32 %v1381, %v1398
    %v1606 = vadd.f32 %v1382, %v1402
    %v1607 = vadd.f32 %v1383, %v1406
    %v1608 = vadd.f32 %v1384, %v1410
    %v1609 = vmax.f32 %v1417, 0.0
    %v1610 = vmax.f32 %v1418, 0.0
    %v1611 = vmax.f32 %v1419, 0.0
    %v1612 = vmax.f32 %v1420, 0.0
    %v1613 = vmax.f32 %v1421, 0.0
    %v1614 = vmax.f32 %v1422, 0.0
    %v1615 = vmax.f32 %v1423, 0.0
    %v1616 = vmax.f32 %v1424, 0.0
    %v1617 = vmax.f32 %v1425, 0.0
    %v1618 = vmax.f32 %v1426, 0.0
    %v1619 = vmax.f32 %v1427, 0.0
    %v1620 = vmax.f32 %v1428, 0.0
    %v1621 = vmax.f32 %v1429, 0.0
    %v1622 = vmax.f32 %v1430, 0.0
    %v1623 = vmax.f32 %v1431, 0.0
    %v1624 = vmax.f32 %v1432, 0.0
    %v1625 = vmax.f32 %v1433, 0.0
    %v1626 = vmax.f32 %v1434, 0.0
    %v1627 = vmax.f32 %v1435, 0.0
    %v1628 = vmax.f32 %v1436, 0.0
    %v1629 = vmax.f32 %v1437, 0.0
    %v1630 = vmax.f32 %v1438, 0.0
    %v1631 = vmax.f32 %v1439, 0.0
    %v1632 = vmax.f32 %v1440, 0.0
    %v1633 = vmax.f32 %v1441, 0.0
    %v1634 = vmax.f32 %v1442, 0.0
    %v1635 = vmax.f32 %v1443, 0.0
    %v1636 = vmax.f32 %v1444, 0.0
    %v1637 = vmax.f32 %v1445, 0.0
    %v1638 = vmax.f32 %v1446, 0.0
    %v1639 = vmax.f32 %v1447, 0.0
    %v1640 = vmax.f32 %v1448, 0.0
    %v1641 = vmax.f32 %v1449, 0.0
    %v1642 = vmax.f32 %v1450, 0.0
    %v1643 = vmax.f32 %v1451, 0.0
    %v1644 = vmax.f32 %v1452, 0.0
    %v1645 = vmax.f32 %v1453, 0.0
    %v1646 = vmax.f32 %v1454, 0.0
    %v1647 = vmax.f32 %v1455, 0.0
    %v1648 = vmax.f32 %v1456, 0.0
    %v1649 = vmax.f32 %v1457, 0.0
    %v1650 = vmax.f32 %v1458, 0.0
    %v1651 = vmax.f32 %v1459, 0.0
    %v1652 = vmax.f32 %v1460, 0.0
    %v1653 = vmax.f32 %v1461, 0.0
    %v1654 = vmax.f32 %v1462, 0.0
    %v1655 = vmax.f32 %v1463, 0.0
    %v1656 = vmax.f32 %v1464, 0.0
    %v1657 = vmax.f32 %v1465, 0.0
    %v1658 = vmax.f32 %v1466, 0.0
    %v1659 = vmax.f32 %v1467, 0.0
    %v1660 = vmax.f32 %v1468, 0.0
    %v1661 = vmax.f32 %v1469, 0.0
    %v1662 = vmax.f32 %v1470, 0.0
    %v1663 = vmax.f32 %v1471, 0.0
    %v1664 = vmax.f32 %v1472, 0.0
    %v1665 = vmax.f32 %v1473, 0.0
    %v1666 = vmax.f32 %v1474, 0.0
    %v1667 = vmax.f32 %v1475, 0.0
    %v1668 = vmax.f32 %v1476, 0.0
    %v1669 = vmax.f32 %v1477, 0.0
    %v1670 = vmax.f32 %v1478, 0.0
    %v1671 = vmax.f32 %v1479, 0.0
    %v1672 = vmax.f32 %v1480, 0.0
    %v1673 = vmax.f32 %v1481, 0.0
    %v1674 = vmax.f32 %v1482, 0.0
    %v1675 = vmax.f32 %v1483, 0.0
    %v1676 = vmax.f32 %v1484, 0.0
    %v1677 = vmax.f32 %v1485, 0.0
    %v1678 = vmax.f32 %v1486, 0.0
    %v1679 = vmax.f32 %v1487, 0.0
    %v1680 = vmax.f32 %v1488, 0.0
    %v1681 = vmax.f32 %v1489, 0.0
    %v1682 = vmax.f32 %v1490, 0.0
    %v1683 = vmax.f32 %v1491, 0.0
    %v1684 = vmax.f32 %v1492, 0.0
    %v1685 = vmax.f32 %v1493, 0.0
    %v1686 = vmax.f32 %v1494, 0.0
    %v1687 = vmax.f32 %v1495, 0.0
    %v1688 = vmax.f32 %v1496, 0.0
    %v1689 = vmax.f32 %v1497, 0.0
    %v1690 = vmax.f32 %v1498, 0.0
    %v1691 = vmax.f32 %v1499, 0.0
    %v1692 = vmax.f32 %v1500, 0.0
    %v1693 = vmax.f32 %v1501, 0.0
    %v1694 = vmax.f32 %v1502, 0.0
    %v1695 = vmax.f32 %v1503, 0.0
    %v1696 = vmax.f32 %v1504, 0.0
    %v1697 = vmax.f32 %v1505, 0.0
    %v1698 = vmax.f32 %v1506, 0.0
    %v1699 = vmax.f32 %v1507, 0.0
    %v1700 = vmax.f32 %v1508, 0.0
    %v1701 = vmax.f32 %v1509, 0.0
    %v1702 = vmax.f32 %v1510, 0.0
    %v1703 = vmax.f32 %v1511, 0.0
    %v1704 = vmax.f32 %v1512, 0.0
    %v1705 = vmax.f32 %v1513, 0.0
    %v1706 = vmax.f32 %v1514, 0.0
    %v1707 = vmax.f32 %v1515, 0.0
    %v1708 = vmax.f32 %v1516, 0.0
    %v1709 = vmax.f32 %v1517, 0.0
    %v1710 = vmax.f32 %v1518, 0.0
    %v1711 = vmax.f32 %v1519, 0.0
    %v1712 = vmax.f32 %v1520, 0.0
    %v1713 = vmax.f32 %v1521, 0.0
    %v1714 = vmax.f32 %v1522, 0.0
    %v1715 = vmax.f32 %v1523, 0.0
    %v1716 = vmax.f32 %v1524, 0.0
    %v1717 = vmax.f32 %v1525, 0.0
    %v1718 = vmax.f32 %v1526, 0.0
    %v1719 = vmax.f32 %v1527, 0.0
    %v1720 = vmax.f32 %v1528, 0.0
    %v1721 = vmax.f32 %v1529, 0.0
    %v1722 = vmax.f32 %v1530, 0.0
    %v1723 = vmax.f32 %v1531, 0.0
    %v1724 = vmax.f32 %v1532, 0.0
    %v1725 = vmax.f32 %v1533, 0.0
    %v1726 = vmax.f32 %v1534, 0.0
    %v1727 = vmax.f32 %v1535, 0.0
    %v1728 = vmax.f32 %v1536, 0.0
    %v1729 = vmax.f32 %v1537, 0.0
    %v1730 = vmax.f32 %v1538, 0.0
    %v1731 = vmax.f32 %v1539, 0.0
    %v1732 = vmax.f32 %v1540, 0.0
    %v1733 = vmax.f32 %v1541, 0.0
    %v1734 = vmax.f32 %v1542, 0.0
    %v1735 = vmax.f32 %v1543, 0.0
    %v1736 = vmax.f32 %v1544, 0.0
    %v1737 = vmax.f32 %v1545, 0.0
    %v1738 = vmax.f32 %v1546, 0.0
    %v1739 = vmax.f32 %v1547, 0.0
    %v1740 = vmax.f32 %v1548, 0.0
    %v1741 = vmax.f32 %v1549, 0.0
    %v1742 = vmax.f32 %v1550, 0.0
    %v1743 = vmax.f32 %v1551, 0.0
    %v1744 = vmax.f32 %v1552, 0.0
    %v1745 = vmax.f32 %v1553, 0.0
    %v1746 = vmax.f32 %v1554, 0.0
    %v1747 = vmax.f32 %v1555, 0.0
    %v1748 = vmax.f32 %v1556, 0.0
    %v1749 = vmax.f32 %v1557, 0.0
    %v1750 = vmax.f32 %v1558, 0.0
    %v1751 = vmax.f32 %v1559, 0.0
    %v1752 = vmax.f32 %v1560, 0.0
    %v1753 = vmax.f32 %v1561, 0.0
    %v1754 = vmax.f32 %v1562, 0.0
    %v1755 = vmax.f32 %v1563, 0.0
    %v1756 = vmax.f32 %v1564, 0.0
    %v1757 = vmax.f32 %v1565, 0.0
    %v1758 = vmax.f32 %v1566, 0.0
    %v1759 = vmax.f32 %v1567, 0.0
    %v1760 = vmax.f32 %v1568, 0.0
    %v1761 = vmax.f32 %v1569, 0.0
    %v1762 = vmax.f32 %v1570, 0.0
    %v1763 = vmax.f32 %v1571, 0.0
    %v1764 = vmax.f32 %v1572, 0.0
    %v1765 = vmax.f32 %v1573, 0.0
    %v1766 = vmax.f32 %v1574, 0.0
    %v1767 = vmax.f32 %v1575, 0.0
    %v1768 = vmax.f32 %v1576, 0.0
    %v1769 = vmax.f32 %v1577, 0.0
    %v1770 = vmax.f32 %v1578, 0.0
    %v1771 = vmax.f32 %v1579, 0.0
    %v1772 = vmax.f32 %v1580, 0.0
    %v1773 = vmax.f32 %v1581, 0.0
    %v1774 = vmax.f32 %v1582, 0.0
    %v1775 = vmax.f32 %v1583, 0.0
    %v1776 = vmax.f32 %v1584, 0.0
    %v1777 = vmax.f32 %v1585, 0.0
    %v1778 = vmax.f32 %v1586, 0.0
    %v1779 = vmax.f32 %v1587, 0.0
    %v1780 = vmax.f32 %v1588, 0.0
    %v1781 = vmax.f32 %v1589, 0.0
    %v1782 = vmax.f32 %v1590, 0.0
    %v1783 = vmax.f32 %v1591, 0.0
    %v1784 = vmax.f32 %v1592, 0.0
    %v1785 = vmax.f32 %v1593, 0.0
    %v1786 = vmax.f32 %v1594, 0.0
    %v1787 = vmax.f32 %v1595, 0.0
    %v1788 = vmax.f32 %v1596, 0.0
    %v1789 = vmax.f32 %v1597, 0.0
    %v1790 = vmax.f32 %v1598, 0.0
    %v1791 = vmax.f32 %v1599, 0.0
    %v1792 = vmax.f32 %v1600, 0.0
    %v1793 = vmax.f32 %v1601, 0.0
    %v1794 = vmax.f32 %v1602, 0.0
    %v1795 = vmax.f32 %v1603, 0.0
    %v1796 = vmax.f32 %v1604, 0.0
    %v1797 = vmax.f32 %v1605, 0.0
    %v1798 = vmax.f32 %v1606, 0.0
    %v1799 = vmax.f32 %v1607, 0.0
    %v1800 = vmax.f32 %v1608, 0.0
    %v1801 = vld [vmem:[#allocation10] sm:$0xff]
    %v1802 = vld [vmem:[#allocation10 + $0x8] sm:$0xff]
    %v1803 = vld [vmem:[#allocation10 + $0x10] sm:$0xff]
    %v1804 = vld [vmem:[#allocation10 + $0x18] sm:$0xff]
    %v1805 = vld [vmem:[#allocation10 + $0x20] sm:$0xff]
    %v1806 = vld [vmem:[#allocation10 + $0x28] sm:$0xff]
    %v1807 = vld [vmem:[#allocation10 + $0x30] sm:$0xff]
    %v1808 = vld [vmem:[#allocation10 + $0x38] sm:$0xff]
    %v1809 = vld [vmem:[#allocation10 + $0x40] sm:$0xff]
    %v1810 = vld [vmem:[#allocation10 + $0x48] sm:$0xff]
    %v1811 = vld [vmem:[#allocation10 + $0x50] sm:$0xff]
    %v1812 = vld [vmem:[#allocation10 + $0x58] sm:$0xff]
    %v1813 = vld [vmem:[#allocation10 + $0x60] sm:$0xff]
    %v1814 = vld [vmem:[#allocation10 + $0x68] sm:$0xff]
    %v1815 = vld [vmem:[#allocation10 + $0x70] sm:$0xff]
    %v1816 = vld [vmem:[#allocation10 + $0x78] sm:$0xff]
    %v1817 = vld [vmem:[#allocation10 + $0x80] sm:$0xff]
    %v1818 = vld [vmem:[#allocation10 + $0x88] sm:$0xff]
    %v1819 = vld [vmem:[#allocation10 + $0x90] sm:$0xff]
    %v1820 = vld [vmem:[#allocation10 + $0x98] sm:$0xff]
    %v1821 = vld [vmem:[#allocation10 + $0xa0] sm:$0xff]
    %v1822 = vld [vmem:[#allocation10 + $0xa8] sm:$0xff]
    %v1823 = vld [vmem:[#allocation10 + $0xb0] sm:$0xff]
    %v1824 = vld [vmem:[#allocation10 + $0xb8] sm:$0xff]
    %v1825 = vld [vmem:[#allocation10 + $0xc0] sm:$0xff]
    %v1826 = vld [vmem:[#allocation10 + $0xc8] sm:$0xff]
    %v1827 = vld [vmem:[#allocation10 + $0xd0] sm:$0xff]
    %v1828 = vld [vmem:[#allocation10 + $0xd8] sm:$0xff]
    %v1829 = vld [vmem:[#allocation10 + $0xe0] sm:$0xff]
    %v1830 = vld [vmem:[#allocation10 + $0xe8] sm:$0xff]
    %v1831 = vld [vmem:[#allocation10 + $0xf0] sm:$0xff]
    %v1832 = vld [vmem:[#allocation10 + $0xf8] sm:$0xff]
    %v1833 = vld [vmem:[#allocation10 + $0x100] sm:$0xff]
    %v1834 = vld [vmem:[#allocation10 + $0x108] sm:$0xff]
    %v1835 = vld [vmem:[#allocation10 + $0x110] sm:$0xff]
    %v1836 = vld [vmem:[#allocation10 + $0x118] sm:$0xff]
    %v1837 = vld [vmem:[#allocation10 + $0x120] sm:$0xff]
    %v1838 = vld [vmem:[#allocation10 + $0x128] sm:$0xff]
    %v1839 = vld [vmem:[#allocation10 + $0x130] sm:$0xff]
    %v1840 = vld [vmem:[#allocation10 + $0x138] sm:$0xff]
    %v1841 = vld [vmem:[#allocation10 + $0x140] sm:$0xff]
    %v1842 = vld [vmem:[#allocation10 + $0x148] sm:$0xff]
    %v1843 = vld [vmem:[#allocation10 + $0x150] sm:$0xff]
    %v1844 = vld [vmem:[#allocation10 + $0x158] sm:$0xff]
    %v1845 = vld [vmem:[#allocation10 + $0x160] sm:$0xff]
    %v1846 = vld [vmem:[#allocation10 + $0x168] sm:$0xff]
    %v1847 = vld [vmem:[#allocation10 + $0x170] sm:$0xff]
    %v1848 = vld [vmem:[#allocation10 + $0x178] sm:$0xff]
    %v1849 = vadd.f32 %v1609, %v1801
    %v1850 = vadd.f32 %v1610, %v1802
    %v1851 = vadd.f32 %v1611, %v1803
    %v1852 = vadd.f32 %v1612, %v1804
    %v1853 = vadd.f32 %v1613, %v1805
    %v1854 = vadd.f32 %v1614, %v1806
    %v1855 = vadd.f32 %v1615, %v1807
    %v1856 = vadd.f32 %v1616, %v1808
    %v1857 = vadd.f32 %v1617, %v1809
    %v1858 = vadd.f32 %v1618, %v1810
    %v1859 = vadd.f32 %v1619, %v1811
    %v1860 = vadd.f32 %v1620, %v1812
    %v1861 = vadd.f32 %v1621, %v1813
    %v1862 = vadd.f32 %v1622, %v1814
    %v1863 = vadd.f32 %v1623, %v1815
    %v1864 = vadd.f32 %v1624, %v1816
    %v1865 = vadd.f32 %v1625, %v1817
    %v1866 = vadd.f32 %v1626, %v1818
    %v1867 = vadd.f32 %v1627, %v1819
    %v1868 = vadd.f32 %v1628, %v1820
    %v1869 = vadd.f32 %v1629, %v1821
    %v1870 = vadd.f32 %v1630, %v1822
    %v1871 = vadd.f32 %v1631, %v1823
    %v1872 = vadd.f32 %v1632, %v1824
    %v1873 = vadd.f32 %v1633, %v1825
    %v1874 = vadd.f32 %v1634, %v1826
    %v1875 = vadd.f32 %v1635, %v1827
    %v1876 = vadd.f32 %v1636, %v1828
    %v1877 = vadd.f32 %v1637, %v1829
    %v1878 = vadd.f32 %v1638, %v1830
    %v1879 = vadd.f32 %v1639, %v1831
    %v1880 = vadd.f32 %v1640, %v1832
    %v1881 = vadd.f32 %v1641, %v1833
    %v1882 = vadd.f32 %v1642, %v1834
    %v1883 = vadd.f32 %v1643, %v1835
    %v1884 = vadd.f32 %v1644, %v1836
    %v1885 = vadd.f32 %v1645, %v1837
    %v1886 = vadd.f32 %v1646, %v1838
    %v1887 = vadd.f32 %v1647, %v1839
    %v1888 = vadd.f32 %v1648, %v1840
    %v1889 = vadd.f32 %v1649, %v1841
    %v1890 = vadd.f32 %v1650, %v1842
    %v1891 = vadd.f32 %v1651, %v1843
    %v1892 = vadd.f32 %v1652, %v1844
    %v1893 = vadd.f32 %v1653, %v1845
    %v1894 = vadd.f32 %v1654, %v1846
    %v1895 = vadd.f32 %v1655, %v1847
    %v1896 = vadd.f32 %v1656, %v1848
    %v1897 = vadd.f32 %v1657, %v1801
    %v1898 = vadd.f32 %v1658, %v1802
    %v1899 = vadd.f32 %v1659, %v1803
    %v1900 = vadd.f32 %v1660, %v1804
    %v1901 = vadd.f32 %v1661, %v1805
    %v1902 = vadd.f32 %v1662, %v1806
    %v1903 = vadd.f32 %v1663, %v1807
    %v1904 = vadd.f32 %v1664, %v1808
    %v1905 = vadd.f32 %v1665, %v1809
    %v1906 = vadd.f32 %v1666, %v1810
    %v1907 = vadd.f32 %v1667, %v1811
    %v1908 = vadd.f32 %v1668, %v1812
    %v1909 = vadd.f32 %v1669, %v1813
    %v1910 = vadd.f32 %v1670, %v1814
    %v1911 = vadd.f32 %v1671, %v1815
    %v1912 = vadd.f32 %v1672, %v1816
    %v1913 = vadd.f32 %v1673, %v1817
    %v1914 = vadd.f32 %v1674, %v1818
    %v1915 = vadd.f32 %v1675, %v1819
    %v1916 = vadd.f32 %v1676, %v1820
    %v1917 = vadd.f32 %v1677, %v1821
    %v1918 = vadd.f32 %v1678, %v1822
    %v1919 = vadd.f32 %v1679, %v1823
    %v1920 = vadd.f32 %v1680, %v1824
    %v1921 = vadd.f32 %v1681, %v1825
    %v1922 = vadd.f32 %v1682, %v1826
    %v1923 = vadd.f32 %v1683, %v1827
    %v1924 = vadd.f32 %v1684, %v1828
    %v1925 = vadd.f32 %v1685, %v1829
    %v1926 = vadd.f32 %v1686, %v1830
    %v1927 = vadd.f32 %v1687, %v1831
    %v1928 = vadd.f32 %v1688, %v1832
    %v1929 = vadd.f32 %v1689, %v1833
    %v1930 = vadd.f32 %v1690, %v1834
    %v1931 = vadd.f32 %v1691, %v1835
    %v1932 = vadd.f32 %v1692, %v1836
    %v1933 = vadd.f32 %v1693, %v1837
    %v1934 = vadd.f32 %v1694, %v1838
    %v1935 = vadd.f32 %v1695, %v1839
    %v1936 = vadd.f32 %v1696, %v1840
    %v1937 = vadd.f32 %v1697, %v1841
    %v1938 = vadd.f32 %v1698, %v1842
    %v1939 = vadd.f32 %v1699, %v1843
    %v1940 = vadd.f32 %v1700, %v1844
    %v1941 = vadd.f32 %v1701, %v1845
    %v1942 = vadd.f32 %v1702, %v1846
    %v1943 = vadd.f32 %v1703, %v1847
    %v1944 = vadd.f32 %v1704, %v1848
    %v1945 = vadd.f32 %v1705, %v1801
    %v1946 = vadd.f32 %v1706, %v1802
    %v1947 = vadd.f32 %v1707, %v1803
    %v1948 = vadd.f32 %v1708, %v1804
    %v1949 = vadd.f32 %v1709, %v1805
    %v1950 = vadd.f32 %v1710, %v1806
    %v1951 = vadd.f32 %v1711, %v1807
    %v1952 = vadd.f32 %v1712, %v1808
    %v1953 = vadd.f32 %v1713, %v1809
    %v1954 = vadd.f32 %v1714, %v1810
    %v1955 = vadd.f32 %v1715, %v1811
    %v1956 = vadd.f32 %v1716, %v1812
    %v1957 = vadd.f32 %v1717, %v1813
    %v1958 = vadd.f32 %v1718, %v1814
    %v1959 = vadd.f32 %v1719, %v1815
    %v1960 = vadd.f32 %v1720, %v1816
    %v1961 = vadd.f32 %v1721, %v1817
    %v1962 = vadd.f32 %v1722, %v1818
    %v1963 = vadd.f32 %v1723, %v1819
    %v1964 = vadd.f32 %v1724, %v1820
    %v1965 = vadd.f32 %v1725, %v1821
    %v1966 = vadd.f32 %v1726, %v1822
    %v1967 = vadd.f32 %v1727, %v1823
    %v1968 = vadd.f32 %v1728, %v1824
    %v1969 = vadd.f32 %v1729, %v1825
    %v1970 = vadd.f32 %v1730, %v1826
    %v1971 = vadd.f32 %v1731, %v1827
    %v1972 = vadd.f32 %v1732, %v1828
    %v1973 = vadd.f32 %v1733, %v1829
    %v1974 = vadd.f32 %v1734, %v1830
    %v1975 = vadd.f32 %v1735, %v1831
    %v1976 = vadd.f32 %v1736, %v1832
    %v1977 = vadd.f32 %v1737, %v1833
    %v1978 = vadd.f32 %v1738, %v1834
    %v1979 = vadd.f32 %v1739, %v1835
    %v1980 = vadd.f32 %v1740, %v1836
    %v1981 = vadd.f32 %v1741, %v1837
    %v1982 = vadd.f32 %v1742, %v1838
    %v1983 = vadd.f32 %v1743, %v1839
    %v1984 = vadd.f32 %v1744, %v1840
    %v1985 = vadd.f32 %v1745, %v1841
    %v1986 = vadd.f32 %v1746, %v1842
    %v1987 = vadd.f32 %v1747, %v1843
    %v1988 = vadd.f32 %v1748, %v1844
    %v1989 = vadd.f32 %v1749, %v1845
    %v1990 = vadd.f32 %v1750, %v1846
    %v1991 = vadd.f32 %v1751, %v1847
    %v1992 = vadd.f32 %v1752, %v1848
    %v1993 = vadd.f32 %v1753, %v1801
    %v1994 = vadd.f32 %v1754, %v1802
    %v1995 = vadd.f32 %v1755, %v1803
    %v1996 = vadd.f32 %v1756, %v1804
    %v1997 = vadd.f32 %v1757, %v1805
    %v1998 = vadd.f32 %v1758, %v1806
    %v1999 = vadd.f32 %v1759, %v1807
    %v2000 = vadd.f32 %v1760, %v1808
    %v2001 = vadd.f32 %v1761, %v1809
    %v2002 = vadd.f32 %v1762, %v1810
    %v2003 = vadd.f32 %v1763, %v1811
    %v2004 = vadd.f32 %v1764, %v1812
    %v2005 = vadd.f32 %v1765, %v1813
    %v2006 = vadd.f32 %v1766, %v1814
    %v2007 = vadd.f32 %v1767, %v1815
    %v2008 = vadd.f32 %v1768, %v1816
    %v2009 = vadd.f32 %v1769, %v1817
    %v2010 = vadd.f32 %v1770, %v1818
    %v2011 = vadd.f32 %v1771, %v1819
    %v2012 = vadd.f32 %v1772, %v1820
    %v2013 = vadd.f32 %v1773, %v1821
    %v2014 = vadd.f32 %v1774, %v1822
    %v2015 = vadd.f32 %v1775, %v1823
    %v2016 = vadd.f32 %v1776, %v1824
    %v2017 = vadd.f32 %v1777, %v1825
    %v2018 = vadd.f32 %v1778, %v1826
    %v2019 = vadd.f32 %v1779, %v1827
    %v2020 = vadd.f32 %v1780, %v1828
    %v2021 = vadd.f32 %v1781, %v1829
    %v2022 = vadd.f32 %v1782, %v1830
    %v2023 = vadd.f32 %v1783, %v1831
    %v2024 = vadd.f32 %v1784, %v1832
    %v2025 = vadd.f32 %v1785, %v1833
    %v2026 = vadd.f32 %v1786, %v1834
    %v2027 = vadd.f32 %v1787, %v1835
    %v2028 = vadd.f32 %v1788, %v1836
    %v2029 = vadd.f32 %v1789, %v1837
    %v2030 = vadd.f32 %v1790, %v1838
    %v2031 = vadd.f32 %v1791, %v1839
    %v2032 = vadd.f32 %v1792, %v1840
    %v2033 = vadd.f32 %v1793, %v1841
    %v2034 = vadd.f32 %v1794, %v1842
    %v2035 = vadd.f32 %v1795, %v1843
    %v2036 = vadd.f32 %v1796, %v1844
    %v2037 = vadd.f32 %v1797, %v1845
    %v2038 = vadd.f32 %v1798, %v1846
    %v2039 = vadd.f32 %v1799, %v1847
    %v2040 = vadd.f32 %v1800, %v1848
    %2041 = vst [vmem:[#allocation11] sm:$0xff] %v1849
    %2042 = vst [vmem:[#allocation11 + $0x8] sm:$0xff] %v1850
    %2043 = vst [vmem:[#allocation11 + $0x10] sm:$0xff] %v1851
    %2044 = vst [vmem:[#allocation11 + $0x18] sm:$0xff] %v1852
    %2045 = vst [vmem:[#allocation11 + $0x20] sm:$0xff] %v1853
    %2046 = vst [vmem:[#allocation11 + $0x28] sm:$0xff] %v1854
    %2047 = vst [vmem:[#allocation11 + $0x30] sm:$0xff] %v1855
    %2048 = vst [vmem:[#allocation11 + $0x38] sm:$0xff] %v1856
    %2049 = vst [vmem:[#allocation11 + $0x40] sm:$0xff] %v1857
    %2050 = vst [vmem:[#allocation11 + $0x48] sm:$0xff] %v1858
    %2051 = vst [vmem:[#allocation11 + $0x50] sm:$0xff] %v1859
    %2052 = vst [vmem:[#allocation11 + $0x58] sm:$0xff] %v1860
    %2053 = vst [vmem:[#allocation11 + $0x60] sm:$0xff] %v1861
    %2054 = vst [vmem:[#allocation11 + $0x68] sm:$0xff] %v1862
    %2055 = vst [vmem:[#allocation11 + $0x70] sm:$0xff] %v1863
    %2056 = vst [vmem:[#allocation11 + $0x78] sm:$0xff] %v1864
    %2057 = vst [vmem:[#allocation11 + $0x80] sm:$0xff] %v1865
    %2058 = vst [vmem:[#allocation11 + $0x88] sm:$0xff] %v1866
    %2059 = vst [vmem:[#allocation11 + $0x90] sm:$0xff] %v1867
    %2060 = vst [vmem:[#allocation11 + $0x98] sm:$0xff] %v1868
    %2061 = vst [vmem:[#allocation11 + $0xa0] sm:$0xff] %v1869
    %2062 = vst [vmem:[#allocation11 + $0xa8] sm:$0xff] %v1870
    %2063 = vst [vmem:[#allocation11 + $0xb0] sm:$0xff] %v1871
    %2064 = vst [vmem:[#allocation11 + $0xb8] sm:$0xff] %v1872
    %2065 = vst [vmem:[#allocation11 + $0xc0] sm:$0xff] %v1873
    %2066 = vst [vmem:[#allocation11 + $0xc8] sm:$0xff] %v1874
    %2067 = vst [vmem:[#allocation11 + $0xd0] sm:$0xff] %v1875
    %2068 = vst [vmem:[#allocation11 + $0xd8] sm:$0xff] %v1876
    %2069 = vst [vmem:[#allocation11 + $0xe0] sm:$0xff] %v1877
    %2070 = vst [vmem:[#allocation11 + $0xe8] sm:$0xff] %v1878
    %2071 = vst [vmem:[#allocation11 + $0xf0] sm:$0xff] %v1879
    %2072 = vst [vmem:[#allocation11 + $0xf8] sm:$0xff] %v1880
    %2073 = vst [vmem:[#allocation11 + $0x100] sm:$0xff] %v1881
    %2074 = vst [vmem:[#allocation11 + $0x108] sm:$0xff] %v1882
    %2075 = vst [vmem:[#allocation11 + $0x110] sm:$0xff] %v1883
    %2076 = vst [vmem:[#allocation11 + $0x118] sm:$0xff] %v1884
    %2077 = vst [vmem:[#allocation11 + $0x120] sm:$0xff] %v1885
    %2078 = vst [vmem:[#allocation11 + $0x128] sm:$0xff] %v1886
    %2079 = vst [vmem:[#allocation11 + $0x130] sm:$0xff] %v1887
    %2080 = vst [vmem:[#allocation11 + $0x138] sm:$0xff] %v1888
    %2081 = vst [vmem:[#allocation11 + $0x140] sm:$0xff] %v1889
    %2082 = vst [vmem:[#allocation11 + $0x148] sm:$0xff] %v1890
    %2083 = vst [vmem:[#allocation11 + $0x150] sm:$0xff] %v1891
    %2084 = vst [vmem:[#allocation11 + $0x158] sm:$0xff] %v1892
    %2085 = vst [vmem:[#allocation11 + $0x160] sm:$0xff] %v1893
    %2086 = vst [vmem:[#allocation11 + $0x168] sm:$0xff] %v1894
    %2087 = vst [vmem:[#allocation11 + $0x170] sm:$0xff] %v1895
    %2088 = vst [vmem:[#allocation11 + $0x178] sm:$0xff] %v1896
    %2089 = vst [vmem:[#allocation11 + $0x180] sm:$0xff] %v1897
    %2090 = vst [vmem:[#allocation11 + $0x188] sm:$0xff] %v1898
    %2091 = vst [vmem:[#allocation11 + $0x190] sm:$0xff] %v1899
    %2092 = vst [vmem:[#allocation11 + $0x198] sm:$0xff] %v1900
    %2093 = vst [vmem:[#allocation11 + $0x1a0] sm:$0xff] %v1901
    %2094 = vst [vmem:[#allocation11 + $0x1a8] sm:$0xff] %v1902
    %2095 = vst [vmem:[#allocation11 + $0x1b0] sm:$0xff] %v1903
    %2096 = vst [vmem:[#allocation11 + $0x1b8] sm:$0xff] %v1904
    %2097 = vst [vmem:[#allocation11 + $0x1c0] sm:$0xff] %v1905
    %2098 = vst [vmem:[#allocation11 + $0x1c8] sm:$0xff] %v1906
    %2099 = vst [vmem:[#allocation11 + $0x1d0] sm:$0xff] %v1907
    %2100 = vst [vmem:[#allocation11 + $0x1d8] sm:$0xff] %v1908
    %2101 = vst [vmem:[#allocation11 + $0x1e0] sm:$0xff] %v1909
    %2102 = vst [vmem:[#allocation11 + $0x1e8] sm:$0xff] %v1910
    %2103 = vst [vmem:[#allocation11 + $0x1f0] sm:$0xff] %v1911
    %2104 = vst [vmem:[#allocation11 + $0x1f8] sm:$0xff] %v1912
    %2105 = vst [vmem:[#allocation11 + $0x200] sm:$0xff] %v1913
    %2106 = vst [vmem:[#allocation11 + $0x208] sm:$0xff] %v1914
    %2107 = vst [vmem:[#allocation11 + $0x210] sm:$0xff] %v1915
    %2108 = vst [vmem:[#allocation11 + $0x218] sm:$0xff] %v1916
    %2109 = vst [vmem:[#allocation11 + $0x220] sm:$0xff] %v1917
    %2110 = vst [vmem:[#allocation11 + $0x228] sm:$0xff] %v1918
    %2111 = vst [vmem:[#allocation11 + $0x230] sm:$0xff] %v1919
    %2112 = vst [vmem:[#allocation11 + $0x238] sm:$0xff] %v1920
    %2113 = vst [vmem:[#allocation11 + $0x240] sm:$0xff] %v1921
    %2114 = vst [vmem:[#allocation11 + $0x248] sm:$0xff] %v1922
    %2115 = vst [vmem:[#allocation11 + $0x250] sm:$0xff] %v1923
    %2116 = vst [vmem:[#allocation11 + $0x258] sm:$0xff] %v1924
    %2117 = vst [vmem:[#allocation11 + $0x260] sm:$0xff] %v1925
    %2118 = vst [vmem:[#allocation11 + $0x268] sm:$0xff] %v1926
    %2119 = vst [vmem:[#allocation11 + $0x270] sm:$0xff] %v1927
    %2120 = vst [vmem:[#allocation11 + $0x278] sm:$0xff] %v1928
    %2121 = vst [vmem:[#allocation11 + $0x280] sm:$0xff] %v1929
    %2122 = vst [vmem:[#allocation11 + $0x288] sm:$0xff] %v1930
    %2123 = vst [vmem:[#allocation11 + $0x290] sm:$0xff] %v1931
    %2124 = vst [vmem:[#allocation11 + $0x298] sm:$0xff] %v1932
    %2125 = vst [vmem:[#allocation11 + $0x2a0] sm:$0xff] %v1933
    %2126 = vst [vmem:[#allocation11 + $0x2a8] sm:$0xff] %v1934
    %2127 = vst [vmem:[#allocation11 + $0x2b0] sm:$0xff] %v1935
    %2128 = vst [vmem:[#allocation11 + $0x2b8] sm:$0xff] %v1936
    %2129 = vst [vmem:[#allocation11 + $0x2c0] sm:$0xff] %v1937
    %2130 = vst [vmem:[#allocation11 + $0x2c8] sm:$0xff] %v1938
    %2131 = vst [vmem:[#allocation11 + $0x2d0] sm:$0xff] %v1939
    %2132 = vst [vmem:[#allocation11 + $0x2d8] sm:$0xff] %v1940
    %2133 = vst [vmem:[#allocation11 + $0x2e0] sm:$0xff] %v1941
    %2134 = vst [vmem:[#allocation11 + $0x2e8] sm:$0xff] %v1942
    %2135 = vst [vmem:[#allocation11 + $0x2f0] sm:$0xff] %v1943
    %2136 = vst [vmem:[#allocation11 + $0x2f8] sm:$0xff] %v1944
    %2137 = vst [vmem:[#allocation11 + $0x300] sm:$0xff] %v1945
    %2138 = vst [vmem:[#allocation11 + $0x308] sm:$0xff] %v1946
    %2139 = vst [vmem:[#allocation11 + $0x310] sm:$0xff] %v1947
    %2140 = vst [vmem:[#allocation11 + $0x318] sm:$0xff] %v1948
    %2141 = vst [vmem:[#allocation11 + $0x320] sm:$0xff] %v1949
    %2142 = vst [vmem:[#allocation11 + $0x328] sm:$0xff] %v1950
    %2143 = vst [vmem:[#allocation11 + $0x330] sm:$0xff] %v1951
    %2144 = vst [vmem:[#allocation11 + $0x338] sm:$0xff] %v1952
    %2145 = vst [vmem:[#allocation11 + $0x340] sm:$0xff] %v1953
    %2146 = vst [vmem:[#allocation11 + $0x348] sm:$0xff] %v1954
    %2147 = vst [vmem:[#allocation11 + $0x350] sm:$0xff] %v1955
    %2148 = vst [vmem:[#allocation11 + $0x358] sm:$0xff] %v1956
    %2149 = vst [vmem:[#allocation11 + $0x360] sm:$0xff] %v1957
    %2150 = vst [vmem:[#allocation11 + $0x368] sm:$0xff] %v1958
    %2151 = vst [vmem:[#allocation11 + $0x370] sm:$0xff] %v1959
    %2152 = vst [vmem:[#allocation11 + $0x378] sm:$0xff] %v1960
    %2153 = vst [vmem:[#allocation11 + $0x380] sm:$0xff] %v1961
    %2154 = vst [vmem:[#allocation11 + $0x388] sm:$0xff] %v1962
    %2155 = vst [vmem:[#allocation11 + $0x390] sm:$0xff] %v1963
    %2156 = vst [vmem:[#allocation11 + $0x398] sm:$0xff] %v1964
    %2157 = vst [vmem:[#allocation11 + $0x3a0] sm:$0xff] %v1965
    %2158 = vst [vmem:[#allocation11 + $0x3a8] sm:$0xff] %v1966
    %2159 = vst [vmem:[#allocation11 + $0x3b0] sm:$0xff] %v1967
    %2160 = vst [vmem:[#allocation11 + $0x3b8] sm:$0xff] %v1968
    %2161 = vst [vmem:[#allocation11 + $0x3c0] sm:$0xff] %v1969
    %2162 = vst [vmem:[#allocation11 + $0x3c8] sm:$0xff] %v1970
    %2163 = vst [vmem:[#allocation11 + $0x3d0] sm:$0xff] %v1971
    %2164 = vst [vmem:[#allocation11 + $0x3d8] sm:$0xff] %v1972
    %2165 = vst [vmem:[#allocation11 + $0x3e0] sm:$0xff] %v1973
    %2166 = vst [vmem:[#allocation11 + $0x3e8] sm:$0xff] %v1974
    %2167 = vst [vmem:[#allocation11 + $0x3f0] sm:$0xff] %v1975
    %2168 = vst [vmem:[#allocation11 + $0x3f8] sm:$0xff] %v1976
    %2169 = vst [vmem:[#allocation11 + $0x400] sm:$0xff] %v1977
    %2170 = vst [vmem:[#allocation11 + $0x408] sm:$0xff] %v1978
    %2171 = vst [vmem:[#allocation11 + $0x410] sm:$0xff] %v1979
    %2172 = vst [vmem:[#allocation11 + $0x418] sm:$0xff] %v1980
    %2173 = vst [vmem:[#allocation11 + $0x420] sm:$0xff] %v1981
    %2174 = vst [vmem:[#allocation11 + $0x428] sm:$0xff] %v1982
    %2175 = vst [vmem:[#allocation11 + $0x430] sm:$0xff] %v1983
    %2176 = vst [vmem:[#allocation11 + $0x438] sm:$0xff] %v1984
    %2177 = vst [vmem:[#allocation11 + $0x440] sm:$0xff] %v1985
    %2178 = vst [vmem:[#allocation11 + $0x448] sm:$0xff] %v1986
    %2179 = vst [vmem:[#allocation11 + $0x450] sm:$0xff] %v1987
    %2180 = vst [vmem:[#allocation11 + $0x458] sm:$0xff] %v1988
    %2181 = vst [vmem:[#allocation11 + $0x460] sm:$0xff] %v1989
    %2182 = vst [vmem:[#allocation11 + $0x468] sm:$0xff] %v1990
    %2183 = vst [vmem:[#allocation11 + $0x470] sm:$0xff] %v1991
    %2184 = vst [vmem:[#allocation11 + $0x478] sm:$0xff] %v1992
    %2185 = vst [vmem:[#allocation11 + $0x480] sm:$0xff] %v1993
    %2186 = vst [vmem:[#allocation11 + $0x488] sm:$0xff] %v1994
    %2187 = vst [vmem:[#allocation11 + $0x490] sm:$0xff] %v1995
    %2188 = vst [vmem:[#allocation11 + $0x498] sm:$0xff] %v1996
    %2189 = vst [vmem:[#allocation11 + $0x4a0] sm:$0xff] %v1997
    %2190 = vst [vmem:[#allocation11 + $0x4a8] sm:$0xff] %v1998
    %2191 = vst [vmem:[#allocation11 + $0x4b0] sm:$0xff] %v1999
    %2192 = vst [vmem:[#allocation11 + $0x4b8] sm:$0xff] %v2000
    %2193 = vst [vmem:[#allocation11 + $0x4c0] sm:$0xff] %v2001
    %2194 = vst [vmem:[#allocation11 + $0x4c8] sm:$0xff] %v2002
    %2195 = vst [vmem:[#allocation11 + $0x4d0] sm:$0xff] %v2003
    %2196 = vst [vmem:[#allocation11 + $0x4d8] sm:$0xff] %v2004
    %2197 = vst [vmem:[#allocation11 + $0x4e0] sm:$0xff] %v2005
    %2198 = vst [vmem:[#allocation11 + $0x4e8] sm:$0xff] %v2006
    %2199 = vst [vmem:[#allocation11 + $0x4f0] sm:$0xff] %v2007
    %2200 = vst [vmem:[#allocation11 + $0x4f8] sm:$0xff] %v2008
    %2201 = vst [vmem:[#allocation11 + $0x500] sm:$0xff] %v2009
    %2202 = vst [vmem:[#allocation11 + $0x508] sm:$0xff] %v2010
    %2203 = vst [vmem:[#allocation11 + $0x510] sm:$0xff] %v2011
    %2204 = vst [vmem:[#allocation11 + $0x518] sm:$0xff] %v2012
    %2205 = vst [vmem:[#allocation11 + $0x520] sm:$0xff] %v2013
    %2206 = vst [vmem:[#allocation11 + $0x528] sm:$0xff] %v2014
    %2207 = vst [vmem:[#allocation11 + $0x530] sm:$0xff] %v2015
    %2208 = vst [vmem:[#allocation11 + $0x538] sm:$0xff] %v2016
    %2209 = vst [vmem:[#allocation11 + $0x540] sm:$0xff] %v2017
    %2210 = vst [vmem:[#allocation11 + $0x548] sm:$0xff] %v2018
    %2211 = vst [vmem:[#allocation11 + $0x550] sm:$0xff] %v2019
    %2212 = vst [vmem:[#allocation11 + $0x558] sm:$0xff] %v2020
    %2213 = vst [vmem:[#allocation11 + $0x560] sm:$0xff] %v2021
    %2214 = vst [vmem:[#allocation11 + $0x568] sm:$0xff] %v2022
    %2215 = vst [vmem:[#allocation11 + $0x570] sm:$0xff] %v2023
    %2216 = vst [vmem:[#allocation11 + $0x578] sm:$0xff] %v2024
    %2217 = vst [vmem:[#allocation11 + $0x580] sm:$0xff] %v2025
    %2218 = vst [vmem:[#allocation11 + $0x588] sm:$0xff] %v2026
    %2219 = vst [vmem:[#allocation11 + $0x590] sm:$0xff] %v2027
    %2220 = vst [vmem:[#allocation11 + $0x598] sm:$0xff] %v2028
    %2221 = vst [vmem:[#allocation11 + $0x5a0] sm:$0xff] %v2029
    %2222 = vst [vmem:[#allocation11 + $0x5a8] sm:$0xff] %v2030
    %2223 = vst [vmem:[#allocation11 + $0x5b0] sm:$0xff] %v2031
    %2224 = vst [vmem:[#allocation11 + $0x5b8] sm:$0xff] %v2032
    %2225 = vst [vmem:[#allocation11 + $0x5c0] sm:$0xff] %v2033
    %2226 = vst [vmem:[#allocation11 + $0x5c8] sm:$0xff] %v2034
    %2227 = vst [vmem:[#allocation11 + $0x5d0] sm:$0xff] %v2035
    %2228 = vst [vmem:[#allocation11 + $0x5d8] sm:$0xff] %v2036
    %2229 = vst [vmem:[#allocation11 + $0x5e0] sm:$0xff] %v2037
    %2230 = vst [vmem:[#allocation11 + $0x5e8] sm:$0xff] %v2038
    %2231 = vst [vmem:[#allocation11 + $0x5f0] sm:$0xff] %v2039
    %2232 = vst [vmem:[#allocation11 + $0x5f8] sm:$0xff] %v2040
    // Predicated region
    $region42: #{tpu_custom_call.1} parent=1 // pred_check
      _
    $region43: #{tpu_custom_call.1} parent=1 // pred_check_branch
      %2234 = sbr.rel (0) target = $region45
    $region44: #{tpu_custom_call.1} parent=1 // pred_region
      %s2236 = ssub.s32 24576, 24576
      %2237 = vsyncadd [#allocation4], %s2236
      %s2238 = sshll.u32 [#allocation11], 4
      %s2239 = int_to_ptr.vmem [resolvable:$true] %s2238
      %2244 = dma.vmem_to_hbm [thread:$0]  %s2239, 24576, %s5, [#allocation4], 768, 768, 48
    $region45: #{tpu_custom_call.1} parent=1 // pred_fallthru
      _
    // Predicated region
    $region46: #{tpu_custom_call.1} parent=1 // pred_check
      _
    $region47: #{tpu_custom_call.1} parent=1 // pred_check_branch
      %2246 = sbr.rel (0) target = $region49
    $region48: #{tpu_custom_call.1} parent=1 // pred_region
      %2247 = dma.done [#allocation4], 24576
    $region49: #{tpu_custom_call.1} parent=1 // pred_fallthru
      _
    %2248 = vsyncpa [#allocation3], 1
    %2249 = vsyncpa [#allocation6], 1
    %2250 = vsyncpa [#allocation9], 1
    %2251 = vsyncpa [#allocation4], 1

</llo_original>
